<compile_context>
chip_gen: v5e
topology: v5e:2x2
jax: 0.10.0
libtpu: 0.0.40
codegen_flags: <defaults>
</compile_context>

<pallas_src>
import jax
import jax.numpy as jnp
from jax import lax
from jax.experimental import pallas as pl
from jax.experimental.pallas import tpu as pltpu
import numpy as np

HIDDEN = 50
INPUT = 1
GP = 128             # per-gate lane padding: gate k occupies lanes [k*GP, k*GP + HIDDEN)
NG = 4 * GP          # fused (padded) gate width


def airmodel_kernel(x_ref, wx_ref, wh_ref, b_ref, wlin_ref, blin_ref, out_ref, xg_ref):
    # x_ref:    (T, B, 1)   time-major input
    # wx_ref:   (1, 1, NG)  fused input->gate weights (input_size == 1), gate-major along lanes
    # wh_ref:   (H, NG)     fused recurrent weights, pre-transposed so h @ wh gives all gates
    # b_ref:    (1, 1, NG)  fused bias b_ih + b_hh (zero in padded lanes)
    # wlin_ref: (1, H)      final Linear weight row
    # blin_ref: (1,)        final Linear bias (SMEM scalar)
    # out_ref:  (T, B)      per-timestep prediction
    # xg_ref:   (T, B, NG)  VMEM scratch: precomputed x_t * W_ih^T + bias for all timesteps
    T, B, _ = x_ref.shape
    H = wh_ref.shape[0]

    # Hoist the input contribution and biases out of the recurrence: one vectorized pass.
    xg_ref[...] = x_ref[...] * wx_ref[...] + b_ref[...]

    wh = wh_ref[...]          # loop-invariant fused recurrent weights (H, NG)
    wlin = wlin_ref[...]      # (1, H)
    blin = blin_ref[0]        # scalar

    def step(t, carry):
        h, c = carry                                                # (B, H), (B, H)
        # Single fused MXU matmul for all four gates.
        gates = xg_ref[t] + jnp.dot(h, wh, preferred_element_type=jnp.float32)   # (B, NG)
        i = jax.nn.sigmoid(gates[:, 0 * GP:0 * GP + H])
        f = jax.nn.sigmoid(gates[:, 1 * GP:1 * GP + H])
        g = jnp.tanh(gates[:, 2 * GP:2 * GP + H])
        o = jax.nn.sigmoid(gates[:, 3 * GP:3 * GP + H])
        c_new = f * c + i * g
        h_new = o * jnp.tanh(c_new)
        # Linear(50 -> 1) fused into the step as a lane reduction (XLU slot).
        y = jnp.sum(h_new * wlin, axis=1) + blin                    # (B,)
        out_ref[pl.ds(t, 1), :] = y[None, :]                        # explicit (1, B) store
        return (h_new, c_new)

    h0 = jnp.zeros((B, H), jnp.float32)
    c0 = jnp.zeros((B, H), jnp.float32)
    lax.fori_loop(0, T, step, (h0, c0), unroll=True)


def air_model_forward(x, params):
    """x: (B, T, 1) float32 -> (B, T, 1) float32."""
    W_ih, W_hh, b_ih, b_hh, W_lin, b_lin = params
    B, T, _ = x.shape
    H = HIDDEN

    # Repack parameters: PyTorch gate order i|f|g|o, each gate zero-padded to GP lanes.
    W_ih_g = W_ih.reshape(4, H).astype(jnp.float32)                 # input_size == 1
    W_hh_g = W_hh.reshape(4, H, H).astype(jnp.float32)
    b_g = (b_ih + b_hh).reshape(4, H).astype(jnp.float32)

    wx_all = jnp.pad(W_ih_g, ((0, 0), (0, GP - H))).reshape(1, 1, NG)      # (1, 1, NG)
    b_all = jnp.pad(b_g, ((0, 0), (0, GP - H))).reshape(1, 1, NG)          # (1, 1, NG)
    wh_t = jnp.transpose(W_hh_g, (0, 2, 1))                                # (4, H_in, H_out)
    wh_all = jnp.transpose(
        jnp.pad(wh_t, ((0, 0), (0, 0), (0, GP - H))), (1, 0, 2)
    ).reshape(H, NG)                                                       # (H, NG)
    wlin = W_lin.reshape(1, H).astype(jnp.float32)                         # (1, H)
    blin = b_lin.reshape(1).astype(jnp.float32)                            # (1,)

    x_tb1 = jnp.transpose(x, (1, 0, 2)).astype(jnp.float32)                # (T, B, 1) time-major

    out_tb = pl.pallas_call(
        airmodel_kernel,
        out_shape=jax.ShapeDtypeStruct((T, B), jnp.float32),
        in_specs=[
            pl.BlockSpec(memory_space=pltpu.MemorySpace.VMEM),   # x
            pl.BlockSpec(memory_space=pltpu.MemorySpace.VMEM),   # wx_all
            pl.BlockSpec(memory_space=pltpu.MemorySpace.VMEM),   # wh_all
            pl.BlockSpec(memory_space=pltpu.MemorySpace.VMEM),   # b_all
            pl.BlockSpec(memory_space=pltpu.MemorySpace.VMEM),   # wlin
            pl.BlockSpec(memory_space=pltpu.MemorySpace.SMEM),   # blin (scalar)
        ],
        out_specs=pl.BlockSpec(memory_space=pltpu.MemorySpace.VMEM),
        scratch_shapes=[pltpu.VMEM((T, B, NG), jnp.float32)],
    )(x_tb1, wx_all, wh_all, b_all, wlin, blin)

    # Restore PyTorch batch_first layout (B, T, 1) in the wrapper.
    return jnp.transpose(out_tb, (1, 0))[..., None]


def reference_forward(x, params):
    """Pure-JAX reference matching PyTorch LSTM + Linear semantics."""
    W_ih, W_hh, b_ih, b_hh, W_lin, b_lin = params
    B, T, _ = x.shape
    H = HIDDEN

    def cell(carry, xt):
        h, c = carry
        gates = xt @ W_ih.T + h @ W_hh.T + b_ih + b_hh              # (B, 4H)
        i = jax.nn.sigmoid(gates[:, 0 * H:1 * H])
        f = jax.nn.sigmoid(gates[:, 1 * H:2 * H])
        g = jnp.tanh(gates[:, 2 * H:3 * H])
        o = jax.nn.sigmoid(gates[:, 3 * H:4 * H])
        c = f * c + i * g
        h = o * jnp.tanh(c)
        return (h, c), h

    xs = jnp.transpose(x, (1, 0, 2))                                # (T, B, 1)
    (_, _), hs = lax.scan(cell, (jnp.zeros((B, H)), jnp.zeros((B, H))), xs)
    y = hs @ W_lin.T + b_lin                                        # (T, B, 1)
    return jnp.transpose(y, (1, 0, 2))


def init_params(key):
    """Deterministic init mimicking PyTorch's U(-1/sqrt(H), 1/sqrt(H))."""
    H = HIDDEN
    k = 1.0 / np.sqrt(H)
    keys = jax.random.split(key, 6)
    W_ih = jax.random.uniform(keys[0], (4 * H, INPUT), jnp.float32, -k, k)
    W_hh = jax.random.uniform(keys[1], (4 * H, H), jnp.float32, -k, k)
    b_ih = jax.random.uniform(keys[2], (4 * H,), jnp.float32, -k, k)
    b_hh = jax.random.uniform(keys[3], (4 * H,), jnp.float32, -k, k)
    W_lin = jax.random.uniform(keys[4], (1, H), jnp.float32, -k, k)
    b_lin = jax.random.uniform(keys[5], (1,), jnp.float32, -k, k)
    return (W_ih, W_hh, b_ih, b_hh, W_lin, b_lin)


if __name__ == "__main__":
    key = jax.random.PRNGKey(0)
    k_x, k_p = jax.random.split(key)

    B, T = 2, 8
    x = jax.random.normal(k_x, (B, T, 1), jnp.float32)
    params = init_params(k_p)

    out = air_model_forward(x, params)
    out = jax.block_until_ready(out)

    ref = jax.block_until_ready(reference_forward(x, params))
    assert out.shape == (B, T, 1), out.shape
    np.testing.assert_allclose(np.asarray(out), np.asarray(ref), rtol=1e-3, atol=1e-3)

    print("KERNEL_OK")
</pallas_src>

<mosaic_0001>
module attributes {stable_mosaic.version = 11 : i64} {
  func.func @airmodel_kernel(%arg0: memref<8x2x1xf32, #tpu.memory_space<vmem>>, %arg1: memref<1x1x512xf32, #tpu.memory_space<vmem>>, %arg2: memref<50x512xf32, #tpu.memory_space<vmem>>, %arg3: memref<1x1x512xf32, #tpu.memory_space<vmem>>, %arg4: memref<1x50xf32, #tpu.memory_space<vmem>>, %arg5: memref<1xf32, #tpu.memory_space<smem>>, %arg6: memref<8x2xf32, #tpu.memory_space<vmem>>, %arg7: memref<8x2x512xf32, #tpu.memory_space<vmem>>) attributes {dimension_semantics = [], scalar_prefetch = 0 : i64, scratch_operands = 1 : i64, tpu.core_type = #tpu.core_type<tc>} {
    %c0 = arith.constant 0 : index
    %c0_0 = arith.constant 0 : index
    %c0_1 = arith.constant 0 : index
    %0 = vector.load %arg0[%c0, %c0_0, %c0_1] : memref<8x2x1xf32, #tpu.memory_space<vmem>>, vector<8x2x1xf32>
    %c0_2 = arith.constant 0 : index
    %c0_3 = arith.constant 0 : index
    %c0_4 = arith.constant 0 : index
    %1 = vector.load %arg1[%c0_2, %c0_3, %c0_4] : memref<1x1x512xf32, #tpu.memory_space<vmem>>, vector<1x1x512xf32>
    %2 = vector.broadcast %0 : vector<8x2x1xf32> to vector<8x2x512xf32>
    %3 = vector.broadcast %1 : vector<1x1x512xf32> to vector<8x2x512xf32>
    %4 = arith.mulf %2, %3 : vector<8x2x512xf32>
    %c0_5 = arith.constant 0 : index
    %c0_6 = arith.constant 0 : index
    %c0_7 = arith.constant 0 : index
    %5 = vector.load %arg3[%c0_5, %c0_6, %c0_7] : memref<1x1x512xf32, #tpu.memory_space<vmem>>, vector<1x1x512xf32>
    %6 = vector.broadcast %5 : vector<1x1x512xf32> to vector<8x2x512xf32>
    %7 = arith.addf %4, %6 : vector<8x2x512xf32>
    %c0_8 = arith.constant 0 : index
    %c0_9 = arith.constant 0 : index
    %c0_10 = arith.constant 0 : index
    %8 = vector.load %arg7[%c0_8, %c0_9, %c0_10] : memref<8x2x512xf32, #tpu.memory_space<vmem>>, vector<8x2x512xf32>
    tpu.vector_store %arg7[%c0_8, %c0_9, %c0_10], %7 {strides = array<i32>} : memref<8x2x512xf32, #tpu.memory_space<vmem>>, vector<8x2x512xf32>,
    %c0_11 = arith.constant 0 : index
    %c0_12 = arith.constant 0 : index
    %9 = vector.load %arg2[%c0_11, %c0_12] : memref<50x512xf32, #tpu.memory_space<vmem>>, vector<50x512xf32>
    %c0_13 = arith.constant 0 : index
    %c0_14 = arith.constant 0 : index
    %10 = vector.load %arg4[%c0_13, %c0_14] : memref<1x50xf32, #tpu.memory_space<vmem>>, vector<1x50xf32>
    %c0_15 = arith.constant 0 : index
    %11 = memref.load %arg5[%c0_15] : memref<1xf32, #tpu.memory_space<smem>>
    %cst = arith.constant 0.000000e+00 : f32
    %12 = vector.broadcast %cst : f32 to vector<2x50xf32>
    %cst_16 = arith.constant 0.000000e+00 : f32
    %13 = vector.broadcast %cst_16 : f32 to vector<2x50xf32>
    %c0_i32 = arith.constant 0 : i32
    %14 = arith.index_cast %c0_i32 : i32 to index
    %c0_17 = arith.constant 0 : index
    %c0_18 = arith.constant 0 : index
    %15 = vector.load %arg7[%14, %c0_17, %c0_18] : memref<8x2x512xf32, #tpu.memory_space<vmem>>, vector<1x2x512xf32>
    %16 = vector.shape_cast %15 : vector<1x2x512xf32> to vector<2x512xf32>
    %cst_19 = arith.constant dense<0.000000e+00> : vector<2x512xf32>
    %17 = tpu.matmul %12, %9, %cst_19 {dimension_numbers = #tpu.dot_dimension_numbers<[1], [0], [0], [1], [0, 0, 1, 1], [], []>} : vector<2x50xf32>, vector<50x512xf32>, vector<2x512xf32> -> vector<2x512xf32>
    %18 = arith.addf %16, %17 : vector<2x512xf32>
    %19 = vector.extract_strided_slice %18 {offsets = [0, 0], sizes = [2, 50], strides = [1, 1]} : vector<2x512xf32> to vector<2x50xf32>
    %20 = arith.negf %19 : vector<2x50xf32>
    %21 = math.exp %20 : vector<2x50xf32>
    %cst_20 = arith.constant 1.000000e+00 : f32
    %22 = vector.broadcast %cst_20 : f32 to vector<2x50xf32>
    %23 = arith.addf %22, %21 : vector<2x50xf32>
    %24 = arith.divf %22, %23 : vector<2x50xf32>
    %25 = vector.extract_strided_slice %18 {offsets = [0, 128], sizes = [2, 50], strides = [1, 1]} : vector<2x512xf32> to vector<2x50xf32>
    %26 = arith.negf %25 : vector<2x50xf32>
    %27 = math.exp %26 : vector<2x50xf32>
    %cst_21 = arith.constant 1.000000e+00 : f32
    %28 = vector.broadcast %cst_21 : f32 to vector<2x50xf32>
    %29 = arith.addf %28, %27 : vector<2x50xf32>
    %30 = arith.divf %28, %29 : vector<2x50xf32>
    %31 = vector.extract_strided_slice %18 {offsets = [0, 256], sizes = [2, 50], strides = [1, 1]} : vector<2x512xf32> to vector<2x50xf32>
    %32 = math.tanh %31 : vector<2x50xf32>
    %33 = vector.extract_strided_slice %18 {offsets = [0, 384], sizes = [2, 50], strides = [1, 1]} : vector<2x512xf32> to vector<2x50xf32>
    %34 = arith.negf %33 : vector<2x50xf32>
    %35 = math.exp %34 : vector<2x50xf32>
    %cst_22 = arith.constant 1.000000e+00 : f32
    %36 = vector.broadcast %cst_22 : f32 to vector<2x50xf32>
    %37 = arith.addf %36, %35 : vector<2x50xf32>
    %38 = arith.divf %36, %37 : vector<2x50xf32>
    %39 = arith.mulf %30, %13 : vector<2x50xf32>
    %40 = arith.mulf %24, %32 : vector<2x50xf32>
    %41 = arith.addf %39, %40 : vector<2x50xf32>
    %42 = math.tanh %41 : vector<2x50xf32>
    %43 = arith.mulf %38, %42 : vector<2x50xf32>
    %44 = vector.broadcast %10 : vector<1x50xf32> to vector<2x50xf32>
    %45 = arith.mulf %43, %44 : vector<2x50xf32>
    %cst_23 = arith.constant dense<0.000000e+00> : vector<2xf32>
    %46 = vector.multi_reduction <add>, %45, %cst_23 [1] : vector<2x50xf32> to vector<2xf32>
    %47 = vector.broadcast %11 : f32 to vector<2xf32>
    %48 = arith.addf %46, %47 : vector<2xf32>
    %49 = vector.shape_cast %48 : vector<2xf32> to vector<1x2xf32>
    %50 = arith.index_cast %c0_i32 : i32 to index
    %c0_24 = arith.constant 0 : index
    %51 = vector.load %arg6[%50, %c0_24] : memref<8x2xf32, #tpu.memory_space<vmem>>, vector<1x2xf32>
    tpu.vector_store %arg6[%50, %c0_24], %49 {strides = array<i32>} : memref<8x2xf32, #tpu.memory_space<vmem>>, vector<1x2xf32>,
    %c1_i32 = arith.constant 1 : i32
    %52 = arith.index_cast %c1_i32 : i32 to index
    %c0_25 = arith.constant 0 : index
    %c0_26 = arith.constant 0 : index
    %53 = vector.load %arg7[%52, %c0_25, %c0_26] : memref<8x2x512xf32, #tpu.memory_space<vmem>>, vector<1x2x512xf32>
    %54 = vector.shape_cast %53 : vector<1x2x512xf32> to vector<2x512xf32>
    %cst_27 = arith.constant dense<0.000000e+00> : vector<2x512xf32>
    %55 = tpu.matmul %43, %9, %cst_27 {dimension_numbers = #tpu.dot_dimension_numbers<[1], [0], [0], [1], [0, 0, 1, 1], [], []>} : vector<2x50xf32>, vector<50x512xf32>, vector<2x512xf32> -> vector<2x512xf32>
    %56 = arith.addf %54, %55 : vector<2x512xf32>
    %57 = vector.extract_strided_slice %56 {offsets = [0, 0], sizes = [2, 50], strides = [1, 1]} : vector<2x512xf32> to vector<2x50xf32>
    %58 = arith.negf %57 : vector<2x50xf32>
    %59 = math.exp %58 : vector<2x50xf32>
    %cst_28 = arith.constant 1.000000e+00 : f32
    %60 = vector.broadcast %cst_28 : f32 to vector<2x50xf32>
    %61 = arith.addf %60, %59 : vector<2x50xf32>
    %62 = arith.divf %60, %61 : vector<2x50xf32>
    %63 = vector.extract_strided_slice %56 {offsets = [0, 128], sizes = [2, 50], strides = [1, 1]} : vector<2x512xf32> to vector<2x50xf32>
    %64 = arith.negf %63 : vector<2x50xf32>
    %65 = math.exp %64 : vector<2x50xf32>
    %cst_29 = arith.constant 1.000000e+00 : f32
    %66 = vector.broadcast %cst_29 : f32 to vector<2x50xf32>
    %67 = arith.addf %66, %65 : vector<2x50xf32>
    %68 = arith.divf %66, %67 : vector<2x50xf32>
    %69 = vector.extract_strided_slice %56 {offsets = [0, 256], sizes = [2, 50], strides = [1, 1]} : vector<2x512xf32> to vector<2x50xf32>
    %70 = math.tanh %69 : vector<2x50xf32>
    %71 = vector.extract_strided_slice %56 {offsets = [0, 384], sizes = [2, 50], strides = [1, 1]} : vector<2x512xf32> to vector<2x50xf32>
    %72 = arith.negf %71 : vector<2x50xf32>
    %73 = math.exp %72 : vector<2x50xf32>
    %cst_30 = arith.constant 1.000000e+00 : f32
    %74 = vector.broadcast %cst_30 : f32 to vector<2x50xf32>
    %75 = arith.addf %74, %73 : vector<2x50xf32>
    %76 = arith.divf %74, %75 : vector<2x50xf32>
    %77 = arith.mulf %68, %41 : vector<2x50xf32>
    %78 = arith.mulf %62, %70 : vector<2x50xf32>
    %79 = arith.addf %77, %78 : vector<2x50xf32>
    %80 = math.tanh %79 : vector<2x50xf32>
    %81 = arith.mulf %76, %80 : vector<2x50xf32>
    %82 = vector.broadcast %10 : vector<1x50xf32> to vector<2x50xf32>
    %83 = arith.mulf %81, %82 : vector<2x50xf32>
    %cst_31 = arith.constant dense<0.000000e+00> : vector<2xf32>
    %84 = vector.multi_reduction <add>, %83, %cst_31 [1] : vector<2x50xf32> to vector<2xf32>
    %85 = vector.broadcast %11 : f32 to vector<2xf32>
    %86 = arith.addf %84, %85 : vector<2xf32>
    %87 = vector.shape_cast %86 : vector<2xf32> to vector<1x2xf32>
    %88 = arith.index_cast %c1_i32 : i32 to index
    %c0_32 = arith.constant 0 : index
    %89 = vector.load %arg6[%88, %c0_32] : memref<8x2xf32, #tpu.memory_space<vmem>>, vector<1x2xf32>
    tpu.vector_store %arg6[%88, %c0_32], %87 {strides = array<i32>} : memref<8x2xf32, #tpu.memory_space<vmem>>, vector<1x2xf32>,
    %c2_i32 = arith.constant 2 : i32
    %90 = arith.index_cast %c2_i32 : i32 to index
    %c0_33 = arith.constant 0 : index
    %c0_34 = arith.constant 0 : index
    %91 = vector.load %arg7[%90, %c0_33, %c0_34] : memref<8x2x512xf32, #tpu.memory_space<vmem>>, vector<1x2x512xf32>
    %92 = vector.shape_cast %91 : vector<1x2x512xf32> to vector<2x512xf32>
    %cst_35 = arith.constant dense<0.000000e+00> : vector<2x512xf32>
    %93 = tpu.matmul %81, %9, %cst_35 {dimension_numbers = #tpu.dot_dimension_numbers<[1], [0], [0], [1], [0, 0, 1, 1], [], []>} : vector<2x50xf32>, vector<50x512xf32>, vector<2x512xf32> -> vector<2x512xf32>
    %94 = arith.addf %92, %93 : vector<2x512xf32>
    %95 = vector.extract_strided_slice %94 {offsets = [0, 0], sizes = [2, 50], strides = [1, 1]} : vector<2x512xf32> to vector<2x50xf32>
    %96 = arith.negf %95 : vector<2x50xf32>
    %97 = math.exp %96 : vector<2x50xf32>
    %cst_36 = arith.constant 1.000000e+00 : f32
    %98 = vector.broadcast %cst_36 : f32 to vector<2x50xf32>
    %99 = arith.addf %98, %97 : vector<2x50xf32>
    %100 = arith.divf %98, %99 : vector<2x50xf32>
    %101 = vector.extract_strided_slice %94 {offsets = [0, 128], sizes = [2, 50], strides = [1, 1]} : vector<2x512xf32> to vector<2x50xf32>
    %102 = arith.negf %101 : vector<2x50xf32>
    %103 = math.exp %102 : vector<2x50xf32>
    %cst_37 = arith.constant 1.000000e+00 : f32
    %104 = vector.broadcast %cst_37 : f32 to vector<2x50xf32>
    %105 = arith.addf %104, %103 : vector<2x50xf32>
    %106 = arith.divf %104, %105 : vector<2x50xf32>
    %107 = vector.extract_strided_slice %94 {offsets = [0, 256], sizes = [2, 50], strides = [1, 1]} : vector<2x512xf32> to vector<2x50xf32>
    %108 = math.tanh %107 : vector<2x50xf32>
    %109 = vector.extract_strided_slice %94 {offsets = [0, 384], sizes = [2, 50], strides = [1, 1]} : vector<2x512xf32> to vector<2x50xf32>
    %110 = arith.negf %109 : vector<2x50xf32>
    %111 = math.exp %110 : vector<2x50xf32>
    %cst_38 = arith.constant 1.000000e+00 : f32
    %112 = vector.broadcast %cst_38 : f32 to vector<2x50xf32>
    %113 = arith.addf %112, %111 : vector<2x50xf32>
    %114 = arith.divf %112, %113 : vector<2x50xf32>
    %115 = arith.mulf %106, %79 : vector<2x50xf32>
    %116 = arith.mulf %100, %108 : vector<2x50xf32>
    %117 = arith.addf %115, %116 : vector<2x50xf32>
    %118 = math.tanh %117 : vector<2x50xf32>
    %119 = arith.mulf %114, %118 : vector<2x50xf32>
    %120 = vector.broadcast %10 : vector<1x50xf32> to vector<2x50xf32>
    %121 = arith.mulf %119, %120 : vector<2x50xf32>
    %cst_39 = arith.constant dense<0.000000e+00> : vector<2xf32>
    %122 = vector.multi_reduction <add>, %121, %cst_39 [1] : vector<2x50xf32> to vector<2xf32>
    %123 = vector.broadcast %11 : f32 to vector<2xf32>
    %124 = arith.addf %122, %123 : vector<2xf32>
    %125 = vector.shape_cast %124 : vector<2xf32> to vector<1x2xf32>
    %126 = arith.index_cast %c2_i32 : i32 to index
    %c0_40 = arith.constant 0 : index
    %127 = vector.load %arg6[%126, %c0_40] : memref<8x2xf32, #tpu.memory_space<vmem>>, vector<1x2xf32>
    tpu.vector_store %arg6[%126, %c0_40], %125 {strides = array<i32>} : memref<8x2xf32, #tpu.memory_space<vmem>>, vector<1x2xf32>,
    %c3_i32 = arith.constant 3 : i32
    %128 = arith.index_cast %c3_i32 : i32 to index
    %c0_41 = arith.constant 0 : index
    %c0_42 = arith.constant 0 : index
    %129 = vector.load %arg7[%128, %c0_41, %c0_42] : memref<8x2x512xf32, #tpu.memory_space<vmem>>, vector<1x2x512xf32>
    %130 = vector.shape_cast %129 : vector<1x2x512xf32> to vector<2x512xf32>
    %cst_43 = arith.constant dense<0.000000e+00> : vector<2x512xf32>
    %131 = tpu.matmul %119, %9, %cst_43 {dimension_numbers = #tpu.dot_dimension_numbers<[1], [0], [0], [1], [0, 0, 1, 1], [], []>} : vector<2x50xf32>, vector<50x512xf32>, vector<2x512xf32> -> vector<2x512xf32>
    %132 = arith.addf %130, %131 : vector<2x512xf32>
    %133 = vector.extract_strided_slice %132 {offsets = [0, 0], sizes = [2, 50], strides = [1, 1]} : vector<2x512xf32> to vector<2x50xf32>
    %134 = arith.negf %133 : vector<2x50xf32>
    %135 = math.exp %134 : vector<2x50xf32>
    %cst_44 = arith.constant 1.000000e+00 : f32
    %136 = vector.broadcast %cst_44 : f32 to vector<2x50xf32>
    %137 = arith.addf %136, %135 : vector<2x50xf32>
    %138 = arith.divf %136, %137 : vector<2x50xf32>
    %139 = vector.extract_strided_slice %132 {offsets = [0, 128], sizes = [2, 50], strides = [1, 1]} : vector<2x512xf32> to vector<2x50xf32>
    %140 = arith.negf %139 : vector<2x50xf32>
    %141 = math.exp %140 : vector<2x50xf32>
    %cst_45 = arith.constant 1.000000e+00 : f32
    %142 = vector.broadcast %cst_45 : f32 to vector<2x50xf32>
    %143 = arith.addf %142, %141 : vector<2x50xf32>
    %144 = arith.divf %142, %143 : vector<2x50xf32>
    %145 = vector.extract_strided_slice %132 {offsets = [0, 256], sizes = [2, 50], strides = [1, 1]} : vector<2x512xf32> to vector<2x50xf32>
    %146 = math.tanh %145 : vector<2x50xf32>
    %147 = vector.extract_strided_slice %132 {offsets = [0, 384], sizes = [2, 50], strides = [1, 1]} : vector<2x512xf32> to vector<2x50xf32>
    %148 = arith.negf %147 : vector<2x50xf32>
    %149 = math.exp %148 : vector<2x50xf32>
    %cst_46 = arith.constant 1.000000e+00 : f32
    %150 = vector.broadcast %cst_46 : f32 to vector<2x50xf32>
    %151 = arith.addf %150, %149 : vector<2x50xf32>
    %152 = arith.divf %150, %151 : vector<2x50xf32>
    %153 = arith.mulf %144, %117 : vector<2x50xf32>
    %154 = arith.mulf %138, %146 : vector<2x50xf32>
    %155 = arith.addf %153, %154 : vector<2x50xf32>
    %156 = math.tanh %155 : vector<2x50xf32>
    %157 = arith.mulf %152, %156 : vector<2x50xf32>
    %158 = vector.broadcast %10 : vector<1x50xf32> to vector<2x50xf32>
    %159 = arith.mulf %157, %158 : vector<2x50xf32>
    %cst_47 = arith.constant dense<0.000000e+00> : vector<2xf32>
    %160 = vector.multi_reduction <add>, %159, %cst_47 [1] : vector<2x50xf32> to vector<2xf32>
    %161 = vector.broadcast %11 : f32 to vector<2xf32>
    %162 = arith.addf %160, %161 : vector<2xf32>
    %163 = vector.shape_cast %162 : vector<2xf32> to vector<1x2xf32>
    %164 = arith.index_cast %c3_i32 : i32 to index
    %c0_48 = arith.constant 0 : index
    %165 = vector.load %arg6[%164, %c0_48] : memref<8x2xf32, #tpu.memory_space<vmem>>, vector<1x2xf32>
    tpu.vector_store %arg6[%164, %c0_48], %163 {strides = array<i32>} : memref<8x2xf32, #tpu.memory_space<vmem>>, vector<1x2xf32>,
    %c4_i32 = arith.constant 4 : i32
    %166 = arith.index_cast %c4_i32 : i32 to index
    %c0_49 = arith.constant 0 : index
    %c0_50 = arith.constant 0 : index
    %167 = vector.load %arg7[%166, %c0_49, %c0_50] : memref<8x2x512xf32, #tpu.memory_space<vmem>>, vector<1x2x512xf32>
    %168 = vector.shape_cast %167 : vector<1x2x512xf32> to vector<2x512xf32>
    %cst_51 = arith.constant dense<0.000000e+00> : vector<2x512xf32>
    %169 = tpu.matmul %157, %9, %cst_51 {dimension_numbers = #tpu.dot_dimension_numbers<[1], [0], [0], [1], [0, 0, 1, 1], [], []>} : vector<2x50xf32>, vector<50x512xf32>, vector<2x512xf32> -> vector<2x512xf32>
    %170 = arith.addf %168, %169 : vector<2x512xf32>
    %171 = vector.extract_strided_slice %170 {offsets = [0, 0], sizes = [2, 50], strides = [1, 1]} : vector<2x512xf32> to vector<2x50xf32>
    %172 = arith.negf %171 : vector<2x50xf32>
    %173 = math.exp %172 : vector<2x50xf32>
    %cst_52 = arith.constant 1.000000e+00 : f32
    %174 = vector.broadcast %cst_52 : f32 to vector<2x50xf32>
    %175 = arith.addf %174, %173 : vector<2x50xf32>
    %176 = arith.divf %174, %175 : vector<2x50xf32>
    %177 = vector.extract_strided_slice %170 {offsets = [0, 128], sizes = [2, 50], strides = [1, 1]} : vector<2x512xf32> to vector<2x50xf32>
    %178 = arith.negf %177 : vector<2x50xf32>
    %179 = math.exp %178 : vector<2x50xf32>
    %cst_53 = arith.constant 1.000000e+00 : f32
    %180 = vector.broadcast %cst_53 : f32 to vector<2x50xf32>
    %181 = arith.addf %180, %179 : vector<2x50xf32>
    %182 = arith.divf %180, %181 : vector<2x50xf32>
    %183 = vector.extract_strided_slice %170 {offsets = [0, 256], sizes = [2, 50], strides = [1, 1]} : vector<2x512xf32> to vector<2x50xf32>
    %184 = math.tanh %183 : vector<2x50xf32>
    %185 = vector.extract_strided_slice %170 {offsets = [0, 384], sizes = [2, 50], strides = [1, 1]} : vector<2x512xf32> to vector<2x50xf32>
    %186 = arith.negf %185 : vector<2x50xf32>
    %187 = math.exp %186 : vector<2x50xf32>
    %cst_54 = arith.constant 1.000000e+00 : f32
    %188 = vector.broadcast %cst_54 : f32 to vector<2x50xf32>
    %189 = arith.addf %188, %187 : vector<2x50xf32>
    %190 = arith.divf %188, %189 : vector<2x50xf32>
    %191 = arith.mulf %182, %155 : vector<2x50xf32>
    %192 = arith.mulf %176, %184 : vector<2x50xf32>
    %193 = arith.addf %191, %192 : vector<2x50xf32>
    %194 = math.tanh %193 : vector<2x50xf32>
    %195 = arith.mulf %190, %194 : vector<2x50xf32>
    %196 = vector.broadcast %10 : vector<1x50xf32> to vector<2x50xf32>
    %197 = arith.mulf %195, %196 : vector<2x50xf32>
    %cst_55 = arith.constant dense<0.000000e+00> : vector<2xf32>
    %198 = vector.multi_reduction <add>, %197, %cst_55 [1] : vector<2x50xf32> to vector<2xf32>
    %199 = vector.broadcast %11 : f32 to vector<2xf32>
    %200 = arith.addf %198, %199 : vector<2xf32>
    %201 = vector.shape_cast %200 : vector<2xf32> to vector<1x2xf32>
    %202 = arith.index_cast %c4_i32 : i32 to index
    %c0_56 = arith.constant 0 : index
    %203 = vector.load %arg6[%202, %c0_56] : memref<8x2xf32, #tpu.memory_space<vmem>>, vector<1x2xf32>
    tpu.vector_store %arg6[%202, %c0_56], %201 {strides = array<i32>} : memref<8x2xf32, #tpu.memory_space<vmem>>, vector<1x2xf32>,
    %c5_i32 = arith.constant 5 : i32
    %204 = arith.index_cast %c5_i32 : i32 to index
    %c0_57 = arith.constant 0 : index
    %c0_58 = arith.constant 0 : index
    %205 = vector.load %arg7[%204, %c0_57, %c0_58] : memref<8x2x512xf32, #tpu.memory_space<vmem>>, vector<1x2x512xf32>
    %206 = vector.shape_cast %205 : vector<1x2x512xf32> to vector<2x512xf32>
    %cst_59 = arith.constant dense<0.000000e+00> : vector<2x512xf32>
    %207 = tpu.matmul %195, %9, %cst_59 {dimension_numbers = #tpu.dot_dimension_numbers<[1], [0], [0], [1], [0, 0, 1, 1], [], []>} : vector<2x50xf32>, vector<50x512xf32>, vector<2x512xf32> -> vector<2x512xf32>
    %208 = arith.addf %206, %207 : vector<2x512xf32>
    %209 = vector.extract_strided_slice %208 {offsets = [0, 0], sizes = [2, 50], strides = [1, 1]} : vector<2x512xf32> to vector<2x50xf32>
    %210 = arith.negf %209 : vector<2x50xf32>
    %211 = math.exp %210 : vector<2x50xf32>
    %cst_60 = arith.constant 1.000000e+00 : f32
    %212 = vector.broadcast %cst_60 : f32 to vector<2x50xf32>
    %213 = arith.addf %212, %211 : vector<2x50xf32>
    %214 = arith.divf %212, %213 : vector<2x50xf32>
    %215 = vector.extract_strided_slice %208 {offsets = [0, 128], sizes = [2, 50], strides = [1, 1]} : vector<2x512xf32> to vector<2x50xf32>
    %216 = arith.negf %215 : vector<2x50xf32>
    %217 = math.exp %216 : vector<2x50xf32>
    %cst_61 = arith.constant 1.000000e+00 : f32
    %218 = vector.broadcast %cst_61 : f32 to vector<2x50xf32>
    %219 = arith.addf %218, %217 : vector<2x50xf32>
    %220 = arith.divf %218, %219 : vector<2x50xf32>
    %221 = vector.extract_strided_slice %208 {offsets = [0, 256], sizes = [2, 50], strides = [1, 1]} : vector<2x512xf32> to vector<2x50xf32>
    %222 = math.tanh %221 : vector<2x50xf32>
    %223 = vector.extract_strided_slice %208 {offsets = [0, 384], sizes = [2, 50], strides = [1, 1]} : vector<2x512xf32> to vector<2x50xf32>
    %224 = arith.negf %223 : vector<2x50xf32>
    %225 = math.exp %224 : vector<2x50xf32>
    %cst_62 = arith.constant 1.000000e+00 : f32
    %226 = vector.broadcast %cst_62 : f32 to vector<2x50xf32>
    %227 = arith.addf %226, %225 : vector<2x50xf32>
    %228 = arith.divf %226, %227 : vector<2x50xf32>
    %229 = arith.mulf %220, %193 : vector<2x50xf32>
    %230 = arith.mulf %214, %222 : vector<2x50xf32>
    %231 = arith.addf %229, %230 : vector<2x50xf32>
    %232 = math.tanh %231 : vector<2x50xf32>
    %233 = arith.mulf %228, %232 : vector<2x50xf32>
    %234 = vector.broadcast %10 : vector<1x50xf32> to vector<2x50xf32>
    %235 = arith.mulf %233, %234 : vector<2x50xf32>
    %cst_63 = arith.constant dense<0.000000e+00> : vector<2xf32>
    %236 = vector.multi_reduction <add>, %235, %cst_63 [1] : vector<2x50xf32> to vector<2xf32>
    %237 = vector.broadcast %11 : f32 to vector<2xf32>
    %238 = arith.addf %236, %237 : vector<2xf32>
    %239 = vector.shape_cast %238 : vector<2xf32> to vector<1x2xf32>
    %240 = arith.index_cast %c5_i32 : i32 to index
    %c0_64 = arith.constant 0 : index
    %241 = vector.load %arg6[%240, %c0_64] : memref<8x2xf32, #tpu.memory_space<vmem>>, vector<1x2xf32>
    tpu.vector_store %arg6[%240, %c0_64], %239 {strides = array<i32>} : memref<8x2xf32, #tpu.memory_space<vmem>>, vector<1x2xf32>,
    %c6_i32 = arith.constant 6 : i32
    %242 = arith.index_cast %c6_i32 : i32 to index
    %c0_65 = arith.constant 0 : index
    %c0_66 = arith.constant 0 : index
    %243 = vector.load %arg7[%242, %c0_65, %c0_66] : memref<8x2x512xf32, #tpu.memory_space<vmem>>, vector<1x2x512xf32>
    %244 = vector.shape_cast %243 : vector<1x2x512xf32> to vector<2x512xf32>
    %cst_67 = arith.constant dense<0.000000e+00> : vector<2x512xf32>
    %245 = tpu.matmul %233, %9, %cst_67 {dimension_numbers = #tpu.dot_dimension_numbers<[1], [0], [0], [1], [0, 0, 1, 1], [], []>} : vector<2x50xf32>, vector<50x512xf32>, vector<2x512xf32> -> vector<2x512xf32>
    %246 = arith.addf %244, %245 : vector<2x512xf32>
    %247 = vector.extract_strided_slice %246 {offsets = [0, 0], sizes = [2, 50], strides = [1, 1]} : vector<2x512xf32> to vector<2x50xf32>
    %248 = arith.negf %247 : vector<2x50xf32>
    %249 = math.exp %248 : vector<2x50xf32>
    %cst_68 = arith.constant 1.000000e+00 : f32
    %250 = vector.broadcast %cst_68 : f32 to vector<2x50xf32>
    %251 = arith.addf %250, %249 : vector<2x50xf32>
    %252 = arith.divf %250, %251 : vector<2x50xf32>
    %253 = vector.extract_strided_slice %246 {offsets = [0, 128], sizes = [2, 50], strides = [1, 1]} : vector<2x512xf32> to vector<2x50xf32>
    %254 = arith.negf %253 : vector<2x50xf32>
    %255 = math.exp %254 : vector<2x50xf32>
    %cst_69 = arith.constant 1.000000e+00 : f32
    %256 = vector.broadcast %cst_69 : f32 to vector<2x50xf32>
    %257 = arith.addf %256, %255 : vector<2x50xf32>
    %258 = arith.divf %256, %257 : vector<2x50xf32>
    %259 = vector.extract_strided_slice %246 {offsets = [0, 256], sizes = [2, 50], strides = [1, 1]} : vector<2x512xf32> to vector<2x50xf32>
    %260 = math.tanh %259 : vector<2x50xf32>
    %261 = vector.extract_strided_slice %246 {offsets = [0, 384], sizes = [2, 50], strides = [1, 1]} : vector<2x512xf32> to vector<2x50xf32>
    %262 = arith.negf %261 : vector<2x50xf32>
    %263 = math.exp %262 : vector<2x50xf32>
    %cst_70 = arith.constant 1.000000e+00 : f32
    %264 = vector.broadcast %cst_70 : f32 to vector<2x50xf32>
    %265 = arith.addf %264, %263 : vector<2x50xf32>
    %266 = arith.divf %264, %265 : vector<2x50xf32>
    %267 = arith.mulf %258, %231 : vector<2x50xf32>
    %268 = arith.mulf %252, %260 : vector<2x50xf32>
    %269 = arith.addf %267, %268 : vector<2x50xf32>
    %270 = math.tanh %269 : vector<2x50xf32>
    %271 = arith.mulf %266, %270 : vector<2x50xf32>
    %272 = vector.broadcast %10 : vector<1x50xf32> to vector<2x50xf32>
    %273 = arith.mulf %271, %272 : vector<2x50xf32>
    %cst_71 = arith.constant dense<0.000000e+00> : vector<2xf32>
    %274 = vector.multi_reduction <add>, %273, %cst_71 [1] : vector<2x50xf32> to vector<2xf32>
    %275 = vector.broadcast %11 : f32 to vector<2xf32>
    %276 = arith.addf %274, %275 : vector<2xf32>
    %277 = vector.shape_cast %276 : vector<2xf32> to vector<1x2xf32>
    %278 = arith.index_cast %c6_i32 : i32 to index
    %c0_72 = arith.constant 0 : index
    %279 = vector.load %arg6[%278, %c0_72] : memref<8x2xf32, #tpu.memory_space<vmem>>, vector<1x2xf32>
    tpu.vector_store %arg6[%278, %c0_72], %277 {strides = array<i32>} : memref<8x2xf32, #tpu.memory_space<vmem>>, vector<1x2xf32>,
    %c7_i32 = arith.constant 7 : i32
    %280 = arith.index_cast %c7_i32 : i32 to index
    %c0_73 = arith.constant 0 : index
    %c0_74 = arith.constant 0 : index
    %281 = vector.load %arg7[%280, %c0_73, %c0_74] : memref<8x2x512xf32, #tpu.memory_space<vmem>>, vector<1x2x512xf32>
    %282 = vector.shape_cast %281 : vector<1x2x512xf32> to vector<2x512xf32>
    %cst_75 = arith.constant dense<0.000000e+00> : vector<2x512xf32>
    %283 = tpu.matmul %271, %9, %cst_75 {dimension_numbers = #tpu.dot_dimension_numbers<[1], [0], [0], [1], [0, 0, 1, 1], [], []>} : vector<2x50xf32>, vector<50x512xf32>, vector<2x512xf32> -> vector<2x512xf32>
    %284 = arith.addf %282, %283 : vector<2x512xf32>
    %285 = vector.extract_strided_slice %284 {offsets = [0, 0], sizes = [2, 50], strides = [1, 1]} : vector<2x512xf32> to vector<2x50xf32>
    %286 = arith.negf %285 : vector<2x50xf32>
    %287 = math.exp %286 : vector<2x50xf32>
    %cst_76 = arith.constant 1.000000e+00 : f32
    %288 = vector.broadcast %cst_76 : f32 to vector<2x50xf32>
    %289 = arith.addf %288, %287 : vector<2x50xf32>
    %290 = arith.divf %288, %289 : vector<2x50xf32>
    %291 = vector.extract_strided_slice %284 {offsets = [0, 128], sizes = [2, 50], strides = [1, 1]} : vector<2x512xf32> to vector<2x50xf32>
    %292 = arith.negf %291 : vector<2x50xf32>
    %293 = math.exp %292 : vector<2x50xf32>
    %cst_77 = arith.constant 1.000000e+00 : f32
    %294 = vector.broadcast %cst_77 : f32 to vector<2x50xf32>
    %295 = arith.addf %294, %293 : vector<2x50xf32>
    %296 = arith.divf %294, %295 : vector<2x50xf32>
    %297 = vector.extract_strided_slice %284 {offsets = [0, 256], sizes = [2, 50], strides = [1, 1]} : vector<2x512xf32> to vector<2x50xf32>
    %298 = math.tanh %297 : vector<2x50xf32>
    %299 = vector.extract_strided_slice %284 {offsets = [0, 384], sizes = [2, 50], strides = [1, 1]} : vector<2x512xf32> to vector<2x50xf32>
    %300 = arith.negf %299 : vector<2x50xf32>
    %301 = math.exp %300 : vector<2x50xf32>
    %cst_78 = arith.constant 1.000000e+00 : f32
    %302 = vector.broadcast %cst_78 : f32 to vector<2x50xf32>
    %303 = arith.addf %302, %301 : vector<2x50xf32>
    %304 = arith.divf %302, %303 : vector<2x50xf32>
    %305 = arith.mulf %296, %269 : vector<2x50xf32>
    %306 = arith.mulf %290, %298 : vector<2x50xf32>
    %307 = arith.addf %305, %306 : vector<2x50xf32>
    %308 = math.tanh %307 : vector<2x50xf32>
    %309 = arith.mulf %304, %308 : vector<2x50xf32>
    %310 = vector.broadcast %10 : vector<1x50xf32> to vector<2x50xf32>
    %311 = arith.mulf %309, %310 : vector<2x50xf32>
    %cst_79 = arith.constant dense<0.000000e+00> : vector<2xf32>
    %312 = vector.multi_reduction <add>, %311, %cst_79 [1] : vector<2x50xf32> to vector<2xf32>
    %313 = vector.broadcast %11 : f32 to vector<2xf32>
    %314 = arith.addf %312, %313 : vector<2xf32>
    %315 = vector.shape_cast %314 : vector<2xf32> to vector<1x2xf32>
    %316 = arith.index_cast %c7_i32 : i32 to index
    %c0_80 = arith.constant 0 : index
    %317 = vector.load %arg6[%316, %c0_80] : memref<8x2xf32, #tpu.memory_space<vmem>>, vector<1x2xf32>
    tpu.vector_store %arg6[%316, %c0_80], %315 {strides = array<i32>} : memref<8x2xf32, #tpu.memory_space<vmem>>, vector<1x2xf32>,
    %c8_i32 = arith.constant 8 : i32
    return
  }
}

</mosaic_0001>

<llo_original>
// kernel: tpu_custom_call.1
$region0: #{tpu_custom_call.1}
  #allocation0 [shape = 'u32[]', space=smem, size = 0x4, offset = 0x4, fixed_abs, tag = 'smem constant byte address 0x4 - core index']
  #allocation1 [shape = 'u32[72,128]{1,0:T(1,128)}', space=vmem, size = 0x9000, scoped, tag = 'internal scratch']
  #allocation2 [shape = 'f32[8,2,512]{2,1,0:T(2,128)}', space=vmem, size = 0x8000, scoped, tag = 'scratch operand']
  #allocation3 [shape = 'f32[1]{0:T(128)S(6)}', space=smem, size = 0x200, scoped, tag = 'scoped memory for tpu_custom_call.1']
  %s0 = inlined_call_operand.vmem [shape: f32[8,2,1], index: 0, kind: input, shape index: {}]
  %s1 = inlined_call_operand.vmem [shape: f32[1,1,512], index: 1, kind: input, shape index: {}]
  %s2 = inlined_call_operand.hbm [shape: f32[50,512], index: 2, kind: input, shape index: {}]
  %s3 = inlined_call_operand.vmem [shape: f32[1,1,512], index: 3, kind: input, shape index: {}]
  %s4 = inlined_call_operand.vmem [shape: f32[1,50], index: 4, kind: input, shape index: {}]
  %s5 = inlined_call_operand.<no memory space> [shape: f32[1], index: 5, kind: input, shape index: {}]
  %s6 = inlined_call_operand.vmem [shape: f32[8,2], index: 6, kind: output, shape index: {}]
  %s7 = sld [smem:[#allocation0]]
  $region38: #{tpu_custom_call.1} parent=0
    _
  %s9 = ssub.s32 1, %s7
  %s10 = scalar_select 0, %s9, %s7
  %11 = sst [smem:[#allocation3]] %s5
  $region1: #{tpu_custom_call.1} parent=0
    #allocation4 [shape = 'u8[114688]{0}', space=vmem, size = 0x1c000, scoped, tag = 'input window, operand 2, single buffered']
    #allocation5 [shape = 's32[1]{0}', space=sflag, size = 0x4, scoped, tag = 'scoped memory for tpu_custom_call.1']
    %12 = vsyncpa [#allocation5], 0
    // Predicated region
    $region2: #{tpu_custom_call.1} parent=1 // pred_check
      _
    $region3: #{tpu_custom_call.1} parent=1 // pred_check_branch
      %14 = sbr.rel (0) target = $region5
    $region4: #{tpu_custom_call.1} parent=1 // pred_region
      _
    $region5: #{tpu_custom_call.1} parent=1 // pred_fallthru
      _
    // Predicated region
    $region6: #{tpu_custom_call.1} parent=1 // pred_check
      _
    $region7: #{tpu_custom_call.1} parent=1 // pred_check_branch
      %16 = sbr.rel (0) target = $region9
    $region8: #{tpu_custom_call.1} parent=1 // pred_region
      _
    $region9: #{tpu_custom_call.1} parent=1 // pred_fallthru
      _
    // Predicated region
    $region10: #{tpu_custom_call.1} parent=1 // pred_check
      _
    $region11: #{tpu_custom_call.1} parent=1 // pred_check_branch
      %18 = sbr.rel (0) target = $region13
    $region12: #{tpu_custom_call.1} parent=1 // pred_region
      %20 = vsyncadd [#allocation5], 0
      %s21 = sshll.u32 %s2, 4
      %s22 = int_to_ptr.hbm [resolvable:$true] %s21
      %s23 = sshll.u32 [#allocation4], 4
      %s24 = int_to_ptr.vmem [resolvable:$true] %s23
      %29 = dma.hbm_to_vmem [thread:$0]  %s22, 3584, %s24, [#allocation5], 512, 512, 32
    $region13: #{tpu_custom_call.1} parent=1 // pred_fallthru
      _
    // Predicated region
    $region14: #{tpu_custom_call.1} parent=1 // pred_check
      _
    $region15: #{tpu_custom_call.1} parent=1 // pred_check_branch
      %31 = sbr.rel (0) target = $region17
    $region16: #{tpu_custom_call.1} parent=1 // pred_region
      _
    $region17: #{tpu_custom_call.1} parent=1 // pred_fallthru
      _
    // Predicated region
    $region18: #{tpu_custom_call.1} parent=1 // pred_check
      _
    $region19: #{tpu_custom_call.1} parent=1 // pred_check_branch
      %33 = sbr.rel (0) target = $region21
    $region20: #{tpu_custom_call.1} parent=1 // pred_region
      _
    $region21: #{tpu_custom_call.1} parent=1 // pred_fallthru
      _
    // Predicated region
    $region22: #{tpu_custom_call.1} parent=1 // pred_check
      _
    $region23: #{tpu_custom_call.1} parent=1 // pred_check_branch
      %35 = sbr.rel (0) target = $region25
    $region24: #{tpu_custom_call.1} parent=1 // pred_region
      _
    $region25: #{tpu_custom_call.1} parent=1 // pred_fallthru
      _
    // Predicated region
    $region26: #{tpu_custom_call.1} parent=1 // pred_check
      _
    $region27: #{tpu_custom_call.1} parent=1 // pred_check_branch
      %37 = sbr.rel (0) target = $region29
    $region28: #{tpu_custom_call.1} parent=1 // pred_region
      %39 = dma.done [#allocation5], 3584
    $region29: #{tpu_custom_call.1} parent=1 // pred_fallthru
      _
    %v40 = vld [vmem:[%s0] sm:$0x3]
    %v41 = vld [vmem:[%s0 + $0x2] sm:$0x3]
    %v42 = vld [vmem:[%s0 + $0x4] sm:$0x3]
    %v43 = vld [vmem:[%s0 + $0x6] sm:$0x3]
    %v44 = vld [vmem:[%s0 + $0x8] sm:$0x3]
    %v45 = vld [vmem:[%s0 + $0xa] sm:$0x3]
    %v46 = vld [vmem:[%s0 + $0xc] sm:$0x3]
    %v47 = vld [vmem:[%s0 + $0xe] sm:$0x3]
    %v48 = vld [vmem:[%s1] sm:$0xf]
    %50 = vset.pattern.permute.xlu0 0
    %51 = vperm.xlu0 %50, %v40
    %v52 = vpop.permute.xlu0 %51
    %55 = vset.pattern.permute.xlu0 0
    %56 = vperm.xlu0 %55, %v41
    %v57 = vpop.permute.xlu0 %56
    %60 = vset.pattern.permute.xlu0 0
    %61 = vperm.xlu0 %60, %v42
    %v62 = vpop.permute.xlu0 %61
    %65 = vset.pattern.permute.xlu0 0
    %66 = vperm.xlu0 %65, %v43
    %v67 = vpop.permute.xlu0 %66
    %70 = vset.pattern.permute.xlu0 0
    %71 = vperm.xlu0 %70, %v44
    %v72 = vpop.permute.xlu0 %71
    %75 = vset.pattern.permute.xlu0 0
    %76 = vperm.xlu0 %75, %v45
    %v77 = vpop.permute.xlu0 %76
    %80 = vset.pattern.permute.xlu0 0
    %81 = vperm.xlu0 %80, %v46
    %v82 = vpop.permute.xlu0 %81
    %85 = vset.pattern.permute.xlu0 0
    %86 = vperm.xlu0 %85, %v47
    %v87 = vpop.permute.xlu0 %86
    %v90 = vperm.slane %v48, 0
    %v91 = vperm.slane %v48, 1
    %v92 = vperm.slane %v48, 2
    %v93 = vperm.slane %v48, 3
    %v98 = vmul.f32 %v52, %v90
    %v99 = vmul.f32 %v52, %v91
    %v100 = vmul.f32 %v52, %v92
    %v101 = vmul.f32 %v52, %v93
    %v102 = vmul.f32 %v57, %v90
    %v103 = vmul.f32 %v57, %v91
    %v104 = vmul.f32 %v57, %v92
    %v105 = vmul.f32 %v57, %v93
    %v106 = vmul.f32 %v62, %v90
    %v107 = vmul.f32 %v62, %v91
    %v108 = vmul.f32 %v62, %v92
    %v109 = vmul.f32 %v62, %v93
    %v110 = vmul.f32 %v67, %v90
    %v111 = vmul.f32 %v67, %v91
    %v112 = vmul.f32 %v67, %v92
    %v113 = vmul.f32 %v67, %v93
    %v114 = vmul.f32 %v72, %v90
    %v115 = vmul.f32 %v72, %v91
    %v116 = vmul.f32 %v72, %v92
    %v117 = vmul.f32 %v72, %v93
    %v118 = vmul.f32 %v77, %v90
    %v119 = vmul.f32 %v77, %v91
    %v120 = vmul.f32 %v77, %v92
    %v121 = vmul.f32 %v77, %v93
    %v122 = vmul.f32 %v82, %v90
    %v123 = vmul.f32 %v82, %v91
    %v124 = vmul.f32 %v82, %v92
    %v125 = vmul.f32 %v82, %v93
    %v126 = vmul.f32 %v87, %v90
    %v127 = vmul.f32 %v87, %v91
    %v128 = vmul.f32 %v87, %v92
    %v129 = vmul.f32 %v87, %v93
    %v130 = vld [vmem:[%s3] sm:$0xf]
    %v132 = vperm.slane %v130, 0
    %v133 = vperm.slane %v130, 1
    %v134 = vperm.slane %v130, 2
    %v135 = vperm.slane %v130, 3
    %v140 = vadd.f32 %v98, %v132
    %v141 = vadd.f32 %v99, %v133
    %v142 = vadd.f32 %v100, %v134
    %v143 = vadd.f32 %v101, %v135
    %v144 = vadd.f32 %v102, %v132
    %v145 = vadd.f32 %v103, %v133
    %v146 = vadd.f32 %v104, %v134
    %v147 = vadd.f32 %v105, %v135
    %v148 = vadd.f32 %v106, %v132
    %v149 = vadd.f32 %v107, %v133
    %v150 = vadd.f32 %v108, %v134
    %v151 = vadd.f32 %v109, %v135
    %v152 = vadd.f32 %v110, %v132
    %v153 = vadd.f32 %v111, %v133
    %v154 = vadd.f32 %v112, %v134
    %v155 = vadd.f32 %v113, %v135
    %v156 = vadd.f32 %v114, %v132
    %v157 = vadd.f32 %v115, %v133
    %v158 = vadd.f32 %v116, %v134
    %v159 = vadd.f32 %v117, %v135
    %v160 = vadd.f32 %v118, %v132
    %v161 = vadd.f32 %v119, %v133
    %v162 = vadd.f32 %v120, %v134
    %v163 = vadd.f32 %v121, %v135
    %v164 = vadd.f32 %v122, %v132
    %v165 = vadd.f32 %v123, %v133
    %v166 = vadd.f32 %v124, %v134
    %v167 = vadd.f32 %v125, %v135
    %v168 = vadd.f32 %v126, %v132
    %v169 = vadd.f32 %v127, %v133
    %v170 = vadd.f32 %v128, %v134
    %v171 = vadd.f32 %v129, %v135
    %v204 = vrot.slane %v141, 6
    %v205 = vrot.slane %v142, 4
    %v206 = vrot.slane %v143, 2
    %v207 = vrot.slane %v145, 6
    %v208 = vrot.slane %v146, 4
    %v209 = vrot.slane %v147, 2
    %v210 = vrot.slane %v149, 6
    %v211 = vrot.slane %v150, 4
    %v212 = vrot.slane %v151, 2
    %v213 = vrot.slane %v153, 6
    %v214 = vrot.slane %v154, 4
    %v215 = vrot.slane %v155, 2
    %v216 = vrot.slane %v157, 6
    %v217 = vrot.slane %v158, 4
    %v218 = vrot.slane %v159, 2
    %v219 = vrot.slane %v161, 6
    %v220 = vrot.slane %v162, 4
    %v221 = vrot.slane %v163, 2
    %v222 = vrot.slane %v165, 6
    %v223 = vrot.slane %v166, 4
    %v224 = vrot.slane %v167, 2
    %v225 = vrot.slane %v169, 6
    %v226 = vrot.slane %v170, 4
    %v227 = vrot.slane %v171, 2
    %vm228 = vcmask 1041408
    %v229 = vsel %vm228, %v140, %v204
    %vm230 = vcmask 1045508
    %v231 = vsel %vm230, %v205, %v206
    %vm232 = vcmask 1043456
    %v233 = vsel %vm232, %v229, %v231
    %v234 = vsel %vm228, %v144, %v207
    %v235 = vsel %vm230, %v208, %v209
    %v236 = vsel %vm232, %v234, %v235
    %v237 = vsel %vm228, %v148, %v210
    %v238 = vsel %vm230, %v211, %v212
    %v239 = vsel %vm232, %v237, %v238
    %v240 = vsel %vm228, %v152, %v213
    %v241 = vsel %vm230, %v214, %v215
    %v242 = vsel %vm232, %v240, %v241
    %v243 = vsel %vm228, %v156, %v216
    %v244 = vsel %vm230, %v217, %v218
    %v245 = vsel %vm232, %v243, %v244
    %v246 = vsel %vm228, %v160, %v219
    %v247 = vsel %vm230, %v220, %v221
    %v248 = vsel %vm232, %v246, %v247
    %v249 = vsel %vm228, %v164, %v222
    %v250 = vsel %vm230, %v223, %v224
    %v251 = vsel %vm232, %v249, %v250
    %v252 = vsel %vm228, %v168, %v225
    %v253 = vsel %vm230, %v226, %v227
    %v254 = vsel %vm232, %v252, %v253
    %263 = vst [vmem:[#allocation2] sm:$0xff] %v233
    %264 = vst [vmem:[#allocation2 + $0x8] sm:$0xff] %v236
    %265 = vst [vmem:[#allocation2 + $0x10] sm:$0xff] %v239
    %266 = vst [vmem:[#allocation2 + $0x18] sm:$0xff] %v242
    %267 = vst [vmem:[#allocation2 + $0x20] sm:$0xff] %v245
    %268 = vst [vmem:[#allocation2 + $0x28] sm:$0xff] %v248
    %269 = vst [vmem:[#allocation2 + $0x30] sm:$0xff] %v251
    %270 = vst [vmem:[#allocation2 + $0x38] sm:$0xff] %v254
    %v271 = vld [vmem:[#allocation4] sm:$0xff]
    %v272 = vld [vmem:[#allocation4 + $0x8] sm:$0xff]
    %v273 = vld [vmem:[#allocation4 + $0x10] sm:$0xff]
    %v274 = vld [vmem:[#allocation4 + $0x18] sm:$0xff]
    %v275 = vld [vmem:[#allocation4 + $0x20] sm:$0xff]
    %v276 = vld [vmem:[#allocation4 + $0x28] sm:$0xff]
    %v277 = vld [vmem:[#allocation4 + $0x30] sm:$0xff]
    %v278 = vld [vmem:[#allocation4 + $0x38] sm:$0xff]
    %v279 = vld [vmem:[#allocation4 + $0x40] sm:$0xff]
    %v280 = vld [vmem:[#allocation4 + $0x48] sm:$0xff]
    %v281 = vld [vmem:[#allocation4 + $0x50] sm:$0xff]
    %v282 = vld [vmem:[#allocation4 + $0x58] sm:$0xff]
    %v283 = vld [vmem:[#allocation4 + $0x60] sm:$0xff]
    %v284 = vld [vmem:[#allocation4 + $0x68] sm:$0xff]
    %v285 = vld [vmem:[#allocation4 + $0x70] sm:$0xff]
    %v286 = vld [vmem:[#allocation4 + $0x78] sm:$0xff]
    %v287 = vld [vmem:[#allocation4 + $0x80] sm:$0xff]
    %v288 = vld [vmem:[#allocation4 + $0x88] sm:$0xff]
    %v289 = vld [vmem:[#allocation4 + $0x90] sm:$0xff]
    %v290 = vld [vmem:[#allocation4 + $0x98] sm:$0xff]
    %v291 = vld [vmem:[#allocation4 + $0xa0] sm:$0xff]
    %v292 = vld [vmem:[#allocation4 + $0xa8] sm:$0xff]
    %v293 = vld [vmem:[#allocation4 + $0xb0] sm:$0xff]
    %v294 = vld [vmem:[#allocation4 + $0xb8] sm:$0xff]
    %v295 = vld [vmem:[#allocation4 + $0xc0] sm:$0x3]
    %v296 = vld [vmem:[#allocation4 + $0xc8] sm:$0x3]
    %v297 = vld [vmem:[#allocation4 + $0xd0] sm:$0x3]
    %v298 = vld [vmem:[#allocation4 + $0xd8] sm:$0x3]
    %v299 = vld [vmem:[%s4] sm:$0x1]
    %s300 = sld [smem:[#allocation3]]
    %v301 = vld [vmem:[#allocation2] sm:$0xff]
    %vm302 = vcmask 408576
    %v304 = vsel %vm302, 0.0, 0
    %v307 = vsel %vm228, %v295, 0
    %v310 = vsel %vm228, %v296, 0
    %v313 = vsel %vm228, %v297, 0
    %v316 = vsel %vm228, %v298, 0
    %318 = vmatpush.msra.mxu0 0.0
    %319 = vmatpush.msra.mxu0 0.0
    %320 = vmatpush.msra.mxu0 0.0
    %321 = vmatpush.msra.mxu0 0.0
    %322 = vmatpush.msra.mxu0 0.0
    %323 = vmatpush.msra.mxu0 0.0
    %324 = vmatpush.msra.mxu0 0.0
    %325 = vmatpush.msra.mxu0 0.0
    %326 = vmatpush.msra.mxu0 0.0
    %327 = vmatpush.msra.mxu0 %v307
    %328 = vmatpush.msra.mxu0 %v291
    %329 = vmatpush.msra.mxu0 %v287
    %330 = vmatpush.msra.mxu0 %v283
    %331 = vmatpush.msra.mxu0 %v279
    %332 = vmatpush.msra.mxu0 %v275
    %333 = vmatpush.msra.mxu0 %v271
    %334 = vmatmul.f32.gmra.mxu0 %v304
    %v335 = vpop.f32.mrf.mxu0
    %v336 = vadd.f32 0.0, %v335
    %337 = vdwg.mxu0
    %338 = vmatpush.msra.mxu0 0.0
    %339 = vmatpush.msra.mxu0 0.0
    %340 = vmatpush.msra.mxu0 0.0
    %341 = vmatpush.msra.mxu0 0.0
    %342 = vmatpush.msra.mxu0 0.0
    %343 = vmatpush.msra.mxu0 0.0
    %344 = vmatpush.msra.mxu0 0.0
    %345 = vmatpush.msra.mxu0 0.0
    %346 = vmatpush.msra.mxu0 0.0
    %347 = vmatpush.msra.mxu0 %v310
    %348 = vmatpush.msra.mxu0 %v292
    %349 = vmatpush.msra.mxu0 %v288
    %350 = vmatpush.msra.mxu0 %v284
    %351 = vmatpush.msra.mxu0 %v280
    %352 = vmatpush.msra.mxu0 %v276
    %353 = vmatpush.msra.mxu0 %v272
    %354 = vmatmul.f32.gmra.mxu0 %v304
    %v355 = vpop.f32.mrf.mxu0
    %v356 = vadd.f32 0.0, %v355
    %357 = vdwg.mxu0
    %358 = vmatpush.msra.mxu0 0.0
    %359 = vmatpush.msra.mxu0 0.0
    %360 = vmatpush.msra.mxu0 0.0
    %361 = vmatpush.msra.mxu0 0.0
    %362 = vmatpush.msra.mxu0 0.0
    %363 = vmatpush.msra.mxu0 0.0
    %364 = vmatpush.msra.mxu0 0.0
    %365 = vmatpush.msra.mxu0 0.0
    %366 = vmatpush.msra.mxu0 0.0
    %367 = vmatpush.msra.mxu0 %v313
    %368 = vmatpush.msra.mxu0 %v293
    %369 = vmatpush.msra.mxu0 %v289
    %370 = vmatpush.msra.mxu0 %v285
    %371 = vmatpush.msra.mxu0 %v281
    %372 = vmatpush.msra.mxu0 %v277
    %373 = vmatpush.msra.mxu0 %v273
    %374 = vmatmul.f32.gmra.mxu0 %v304
    %v375 = vpop.f32.mrf.mxu0
    %v376 = vadd.f32 0.0, %v375
    %377 = vdwg.mxu0
    %378 = vmatpush.msra.mxu0 0.0
    %379 = vmatpush.msra.mxu0 0.0
    %380 = vmatpush.msra.mxu0 0.0
    %381 = vmatpush.msra.mxu0 0.0
    %382 = vmatpush.msra.mxu0 0.0
    %383 = vmatpush.msra.mxu0 0.0
    %384 = vmatpush.msra.mxu0 0.0
    %385 = vmatpush.msra.mxu0 0.0
    %386 = vmatpush.msra.mxu0 0.0
    %387 = vmatpush.msra.mxu0 %v316
    %388 = vmatpush.msra.mxu0 %v294
    %389 = vmatpush.msra.mxu0 %v290
    %390 = vmatpush.msra.mxu0 %v286
    %391 = vmatpush.msra.mxu0 %v282
    %392 = vmatpush.msra.mxu0 %v278
    %393 = vmatpush.msra.mxu0 %v274
    %394 = vmatmul.f32.gmra.mxu0 %v304
    %v395 = vpop.f32.mrf.mxu0
    %v396 = vadd.f32 0.0, %v395
    %397 = vdwg.mxu0
    %v402 = vrot.slane %v356, 6
    %v403 = vrot.slane %v376, 4
    %v404 = vrot.slane %v396, 2
    %v405 = vsel %vm228, %v336, %v402
    %v406 = vsel %vm230, %v403, %v404
    %v407 = vsel %vm232, %v405, %v406
    %v409 = vadd.f32 %v301, %v407
    %v410 = vxor.u32 %v409, 2147483648
    %v411 = vmul.f32 %v410, 1.442695
    %v412 = vpow.pop %v411
    %v413 = vadd.f32 %v412, 1.0
    %v414 = vrcp.pop %v413
    %v415 = vmul.f32 %v413, %v414
    %v416 = vsub.f32 1.0, %v415
    %v417 = vmul.f32 %v414, %v416
    %v418 = vadd.f32 %v414, %v417
    %vm419 = vweird.f32 %v413
    %vm420 = vweird.f32 %v414
    %vm421 = vmor %vm419, %vm420
    %v422 = vsel %vm421, %v414, %v418
    %v423 = vand.u32 2147483647, %v413
    %vm424 = vcmp.eq.f32.partialorder %v423, 8.507059e+37
    %v425 = vand.u32 %v413, 2147483648
    %v426 = vor.u32 1.1754944e-38, %v425
    %v427 = vsel %vm424, %v426, %v422
    %v428 = vmul.f32 1.0, %v427
    %v430 = vrot.slane %v409, 2
    %v432 = vxor.u32 %v430, 2147483648
    %v433 = vmul.f32 %v432, 1.442695
    %v434 = vpow.pop %v433
    %v435 = vadd.f32 %v434, 1.0
    %v436 = vrcp.pop %v435
    %v437 = vmul.f32 %v435, %v436
    %v438 = vsub.f32 1.0, %v437
    %v439 = vmul.f32 %v436, %v438
    %v440 = vadd.f32 %v436, %v439
    %vm441 = vweird.f32 %v435
    %vm442 = vweird.f32 %v436
    %vm443 = vmor %vm441, %vm442
    %v444 = vsel %vm443, %v436, %v440
    %v445 = vand.u32 2147483647, %v435
    %vm446 = vcmp.eq.f32.partialorder %v445, 8.507059e+37
    %v447 = vand.u32 %v435, 2147483648
    %v448 = vor.u32 1.1754944e-38, %v447
    %v449 = vsel %vm446, %v448, %v444
    %v450 = vmul.f32 1.0, %v449
    %v451 = vrot.slane %v409, 4
    %v453 = vtanh.pop %v451
    %v454 = vrot.slane %v409, 6
    %v456 = vxor.u32 %v454, 2147483648
    %v457 = vmul.f32 %v456, 1.442695
    %v458 = vpow.pop %v457
    %v459 = vadd.f32 %v458, 1.0
    %v460 = vrcp.pop %v459
    %v461 = vmul.f32 %v459, %v460
    %v462 = vsub.f32 1.0, %v461
    %v463 = vmul.f32 %v460, %v462
    %v464 = vadd.f32 %v460, %v463
    %vm465 = vweird.f32 %v459
    %vm466 = vweird.f32 %v460
    %vm467 = vmor %vm465, %vm466
    %v468 = vsel %vm467, %v460, %v464
    %v469 = vand.u32 2147483647, %v459
    %vm470 = vcmp.eq.f32.partialorder %v469, 8.507059e+37
    %v471 = vand.u32 %v459, 2147483648
    %v472 = vor.u32 1.1754944e-38, %v471
    %v473 = vsel %vm470, %v472, %v468
    %v474 = vmul.f32 1.0, %v473
    %v475 = vmul.f32 %v450, 0.0
    %v476 = vmul.f32 %v428, %v453
    %v477 = vadd.f32 %v475, %v476
    %v478 = vtanh.pop %v477
    %v479 = vmul.f32 %v474, %v478
    %v481 = vperm.slane %v299, 0
    %v483 = vmul.f32 %v479, %v481
    %vm484 = vcmask 402432
    %v485 = vsel %vm484, %v483, 0.0
    %486 = vadd.xlane.f32.xlu0 %v485
    %v487 = vpop.xlane.xlu0 %486
    %v488 = vstv %s300
    %v489 = vadd.f32 %v487, %v488
    %v491 = vlaneseq
    %v492 = vand.u32 %v491, 127
    %v493 = vperm.slane %v489, %v492
    %vm495 = vcmask 8192
    %496 = vst.msk [vmem:[%s6] sm:$0x1] %vm495, %v493
    %s497 = scalar_lea.vmem [#allocation2], 8
    %v498 = vld [vmem:[%s497] sm:$0xff]
    %v500 = vsel %vm302, %v479, 0
    %502 = vmatpush.msra.mxu0 0.0
    %503 = vmatpush.msra.mxu0 0.0
    %504 = vmatpush.msra.mxu0 0.0
    %505 = vmatpush.msra.mxu0 0.0
    %506 = vmatpush.msra.mxu0 0.0
    %507 = vmatpush.msra.mxu0 0.0
    %508 = vmatpush.msra.mxu0 0.0
    %509 = vmatpush.msra.mxu0 0.0
    %510 = vmatpush.msra.mxu0 0.0
    %511 = vmatpush.msra.mxu0 %v307
    %512 = vmatpush.msra.mxu0 %v291
    %513 = vmatpush.msra.mxu0 %v287
    %514 = vmatpush.msra.mxu0 %v283
    %515 = vmatpush.msra.mxu0 %v279
    %516 = vmatpush.msra.mxu0 %v275
    %517 = vmatpush.msra.mxu0 %v271
    %518 = vmatmul.f32.gmra.mxu0 %v500
    %v519 = vpop.f32.mrf.mxu0
    %v520 = vadd.f32 0.0, %v519
    %521 = vdwg.mxu0
    %522 = vmatpush.msra.mxu0 0.0
    %523 = vmatpush.msra.mxu0 0.0
    %524 = vmatpush.msra.mxu0 0.0
    %525 = vmatpush.msra.mxu0 0.0
    %526 = vmatpush.msra.mxu0 0.0
    %527 = vmatpush.msra.mxu0 0.0
    %528 = vmatpush.msra.mxu0 0.0
    %529 = vmatpush.msra.mxu0 0.0
    %530 = vmatpush.msra.mxu0 0.0
    %531 = vmatpush.msra.mxu0 %v310
    %532 = vmatpush.msra.mxu0 %v292
    %533 = vmatpush.msra.mxu0 %v288
    %534 = vmatpush.msra.mxu0 %v284
    %535 = vmatpush.msra.mxu0 %v280
    %536 = vmatpush.msra.mxu0 %v276
    %537 = vmatpush.msra.mxu0 %v272
    %538 = vmatmul.f32.gmra.mxu0 %v500
    %v539 = vpop.f32.mrf.mxu0
    %v540 = vadd.f32 0.0, %v539
    %541 = vdwg.mxu0
    %542 = vmatpush.msra.mxu0 0.0
    %543 = vmatpush.msra.mxu0 0.0
    %544 = vmatpush.msra.mxu0 0.0
    %545 = vmatpush.msra.mxu0 0.0
    %546 = vmatpush.msra.mxu0 0.0
    %547 = vmatpush.msra.mxu0 0.0
    %548 = vmatpush.msra.mxu0 0.0
    %549 = vmatpush.msra.mxu0 0.0
    %550 = vmatpush.msra.mxu0 0.0
    %551 = vmatpush.msra.mxu0 %v313
    %552 = vmatpush.msra.mxu0 %v293
    %553 = vmatpush.msra.mxu0 %v289
    %554 = vmatpush.msra.mxu0 %v285
    %555 = vmatpush.msra.mxu0 %v281
    %556 = vmatpush.msra.mxu0 %v277
    %557 = vmatpush.msra.mxu0 %v273
    %558 = vmatmul.f32.gmra.mxu0 %v500
    %v559 = vpop.f32.mrf.mxu0
    %v560 = vadd.f32 0.0, %v559
    %561 = vdwg.mxu0
    %562 = vmatpush.msra.mxu0 0.0
    %563 = vmatpush.msra.mxu0 0.0
    %564 = vmatpush.msra.mxu0 0.0
    %565 = vmatpush.msra.mxu0 0.0
    %566 = vmatpush.msra.mxu0 0.0
    %567 = vmatpush.msra.mxu0 0.0
    %568 = vmatpush.msra.mxu0 0.0
    %569 = vmatpush.msra.mxu0 0.0
    %570 = vmatpush.msra.mxu0 0.0
    %571 = vmatpush.msra.mxu0 %v316
    %572 = vmatpush.msra.mxu0 %v294
    %573 = vmatpush.msra.mxu0 %v290
    %574 = vmatpush.msra.mxu0 %v286
    %575 = vmatpush.msra.mxu0 %v282
    %576 = vmatpush.msra.mxu0 %v278
    %577 = vmatpush.msra.mxu0 %v274
    %578 = vmatmul.f32.gmra.mxu0 %v500
    %v579 = vpop.f32.mrf.mxu0
    %v580 = vadd.f32 0.0, %v579
    %581 = vdwg.mxu0
    %v586 = vrot.slane %v540, 6
    %v587 = vrot.slane %v560, 4
    %v588 = vrot.slane %v580, 2
    %v589 = vsel %vm228, %v520, %v586
    %v590 = vsel %vm230, %v587, %v588
    %v591 = vsel %vm232, %v589, %v590
    %v593 = vadd.f32 %v498, %v591
    %v594 = vxor.u32 %v593, 2147483648
    %v595 = vmul.f32 %v594, 1.442695
    %v596 = vpow.pop %v595
    %v597 = vadd.f32 %v596, 1.0
    %v598 = vrcp.pop %v597
    %v599 = vmul.f32 %v597, %v598
    %v600 = vsub.f32 1.0, %v599
    %v601 = vmul.f32 %v598, %v600
    %v602 = vadd.f32 %v598, %v601
    %vm603 = vweird.f32 %v597
    %vm604 = vweird.f32 %v598
    %vm605 = vmor %vm603, %vm604
    %v606 = vsel %vm605, %v598, %v602
    %v607 = vand.u32 2147483647, %v597
    %vm608 = vcmp.eq.f32.partialorder %v607, 8.507059e+37
    %v609 = vand.u32 %v597, 2147483648
    %v610 = vor.u32 1.1754944e-38, %v609
    %v611 = vsel %vm608, %v610, %v606
    %v612 = vmul.f32 1.0, %v611
    %v614 = vrot.slane %v593, 2
    %v616 = vxor.u32 %v614, 2147483648
    %v617 = vmul.f32 %v616, 1.442695
    %v618 = vpow.pop %v617
    %v619 = vadd.f32 %v618, 1.0
    %v620 = vrcp.pop %v619
    %v621 = vmul.f32 %v619, %v620
    %v622 = vsub.f32 1.0, %v621
    %v623 = vmul.f32 %v620, %v622
    %v624 = vadd.f32 %v620, %v623
    %vm625 = vweird.f32 %v619
    %vm626 = vweird.f32 %v620
    %vm627 = vmor %vm625, %vm626
    %v628 = vsel %vm627, %v620, %v624
    %v629 = vand.u32 2147483647, %v619
    %vm630 = vcmp.eq.f32.partialorder %v629, 8.507059e+37
    %v631 = vand.u32 %v619, 2147483648
    %v632 = vor.u32 1.1754944e-38, %v631
    %v633 = vsel %vm630, %v632, %v628
    %v634 = vmul.f32 1.0, %v633
    %v635 = vrot.slane %v593, 4
    %v637 = vtanh.pop %v635
    %v638 = vrot.slane %v593, 6
    %v640 = vxor.u32 %v638, 2147483648
    %v641 = vmul.f32 %v640, 1.442695
    %v642 = vpow.pop %v641
    %v643 = vadd.f32 %v642, 1.0
    %v644 = vrcp.pop %v643
    %v645 = vmul.f32 %v643, %v644
    %v646 = vsub.f32 1.0, %v645
    %v647 = vmul.f32 %v644, %v646
    %v648 = vadd.f32 %v644, %v647
    %vm649 = vweird.f32 %v643
    %vm650 = vweird.f32 %v644
    %vm651 = vmor %vm649, %vm650
    %v652 = vsel %vm651, %v644, %v648
    %v653 = vand.u32 2147483647, %v643
    %vm654 = vcmp.eq.f32.partialorder %v653, 8.507059e+37
    %v655 = vand.u32 %v643, 2147483648
    %v656 = vor.u32 1.1754944e-38, %v655
    %v657 = vsel %vm654, %v656, %v652
    %v658 = vmul.f32 1.0, %v657
    %v659 = vmul.f32 %v634, %v477
    %v660 = vmul.f32 %v612, %v637
    %v661 = vadd.f32 %v659, %v660
    %v662 = vtanh.pop %v661
    %v663 = vmul.f32 %v658, %v662
    %v664 = vmul.f32 %v663, %v481
    %v665 = vsel %vm484, %v664, 0.0
    %666 = vadd.xlane.f32.xlu0 %v665
    %v667 = vpop.xlane.xlu0 %666
    %v668 = vadd.f32 %v667, %v488
    %v670 = vperm.slane %v668, %v492
    %672 = vst.msk [vmem:[%s6 + $0x1] sm:$0x1] %vm495, %v670
    %s673 = scalar_lea.vmem [#allocation2], 16
    %v674 = vld [vmem:[%s673] sm:$0xff]
    %v676 = vsel %vm302, %v663, 0
    %678 = vmatpush.msra.mxu0 0.0
    %679 = vmatpush.msra.mxu0 0.0
    %680 = vmatpush.msra.mxu0 0.0
    %681 = vmatpush.msra.mxu0 0.0
    %682 = vmatpush.msra.mxu0 0.0
    %683 = vmatpush.msra.mxu0 0.0
    %684 = vmatpush.msra.mxu0 0.0
    %685 = vmatpush.msra.mxu0 0.0
    %686 = vmatpush.msra.mxu0 0.0
    %687 = vmatpush.msra.mxu0 %v307
    %688 = vmatpush.msra.mxu0 %v291
    %689 = vmatpush.msra.mxu0 %v287
    %690 = vmatpush.msra.mxu0 %v283
    %691 = vmatpush.msra.mxu0 %v279
    %692 = vmatpush.msra.mxu0 %v275
    %693 = vmatpush.msra.mxu0 %v271
    %694 = vmatmul.f32.gmra.mxu0 %v676
    %v695 = vpop.f32.mrf.mxu0
    %v696 = vadd.f32 0.0, %v695
    %697 = vdwg.mxu0
    %698 = vmatpush.msra.mxu0 0.0
    %699 = vmatpush.msra.mxu0 0.0
    %700 = vmatpush.msra.mxu0 0.0
    %701 = vmatpush.msra.mxu0 0.0
    %702 = vmatpush.msra.mxu0 0.0
    %703 = vmatpush.msra.mxu0 0.0
    %704 = vmatpush.msra.mxu0 0.0
    %705 = vmatpush.msra.mxu0 0.0
    %706 = vmatpush.msra.mxu0 0.0
    %707 = vmatpush.msra.mxu0 %v310
    %708 = vmatpush.msra.mxu0 %v292
    %709 = vmatpush.msra.mxu0 %v288
    %710 = vmatpush.msra.mxu0 %v284
    %711 = vmatpush.msra.mxu0 %v280
    %712 = vmatpush.msra.mxu0 %v276
    %713 = vmatpush.msra.mxu0 %v272
    %714 = vmatmul.f32.gmra.mxu0 %v676
    %v715 = vpop.f32.mrf.mxu0
    %v716 = vadd.f32 0.0, %v715
    %717 = vdwg.mxu0
    %718 = vmatpush.msra.mxu0 0.0
    %719 = vmatpush.msra.mxu0 0.0
    %720 = vmatpush.msra.mxu0 0.0
    %721 = vmatpush.msra.mxu0 0.0
    %722 = vmatpush.msra.mxu0 0.0
    %723 = vmatpush.msra.mxu0 0.0
    %724 = vmatpush.msra.mxu0 0.0
    %725 = vmatpush.msra.mxu0 0.0
    %726 = vmatpush.msra.mxu0 0.0
    %727 = vmatpush.msra.mxu0 %v313
    %728 = vmatpush.msra.mxu0 %v293
    %729 = vmatpush.msra.mxu0 %v289
    %730 = vmatpush.msra.mxu0 %v285
    %731 = vmatpush.msra.mxu0 %v281
    %732 = vmatpush.msra.mxu0 %v277
    %733 = vmatpush.msra.mxu0 %v273
    %734 = vmatmul.f32.gmra.mxu0 %v676
    %v735 = vpop.f32.mrf.mxu0
    %v736 = vadd.f32 0.0, %v735
    %737 = vdwg.mxu0
    %738 = vmatpush.msra.mxu0 0.0
    %739 = vmatpush.msra.mxu0 0.0
    %740 = vmatpush.msra.mxu0 0.0
    %741 = vmatpush.msra.mxu0 0.0
    %742 = vmatpush.msra.mxu0 0.0
    %743 = vmatpush.msra.mxu0 0.0
    %744 = vmatpush.msra.mxu0 0.0
    %745 = vmatpush.msra.mxu0 0.0
    %746 = vmatpush.msra.mxu0 0.0
    %747 = vmatpush.msra.mxu0 %v316
    %748 = vmatpush.msra.mxu0 %v294
    %749 = vmatpush.msra.mxu0 %v290
    %750 = vmatpush.msra.mxu0 %v286
    %751 = vmatpush.msra.mxu0 %v282
    %752 = vmatpush.msra.mxu0 %v278
    %753 = vmatpush.msra.mxu0 %v274
    %754 = vmatmul.f32.gmra.mxu0 %v676
    %v755 = vpop.f32.mrf.mxu0
    %v756 = vadd.f32 0.0, %v755
    %757 = vdwg.mxu0
    %v762 = vrot.slane %v716, 6
    %v763 = vrot.slane %v736, 4
    %v764 = vrot.slane %v756, 2
    %v765 = vsel %vm228, %v696, %v762
    %v766 = vsel %vm230, %v763, %v764
    %v767 = vsel %vm232, %v765, %v766
    %v769 = vadd.f32 %v674, %v767
    %v770 = vxor.u32 %v769, 2147483648
    %v771 = vmul.f32 %v770, 1.442695
    %v772 = vpow.pop %v771
    %v773 = vadd.f32 %v772, 1.0
    %v774 = vrcp.pop %v773
    %v775 = vmul.f32 %v773, %v774
    %v776 = vsub.f32 1.0, %v775
    %v777 = vmul.f32 %v774, %v776
    %v778 = vadd.f32 %v774, %v777
    %vm779 = vweird.f32 %v773
    %vm780 = vweird.f32 %v774
    %vm781 = vmor %vm779, %vm780
    %v782 = vsel %vm781, %v774, %v778
    %v783 = vand.u32 2147483647, %v773
    %vm784 = vcmp.eq.f32.partialorder %v783, 8.507059e+37
    %v785 = vand.u32 %v773, 2147483648
    %v786 = vor.u32 1.1754944e-38, %v785
    %v787 = vsel %vm784, %v786, %v782
    %v788 = vmul.f32 1.0, %v787
    %v790 = vrot.slane %v769, 2
    %v792 = vxor.u32 %v790, 2147483648
    %v793 = vmul.f32 %v792, 1.442695
    %v794 = vpow.pop %v793
    %v795 = vadd.f32 %v794, 1.0
    %v796 = vrcp.pop %v795
    %v797 = vmul.f32 %v795, %v796
    %v798 = vsub.f32 1.0, %v797
    %v799 = vmul.f32 %v796, %v798
    %v800 = vadd.f32 %v796, %v799
    %vm801 = vweird.f32 %v795
    %vm802 = vweird.f32 %v796
    %vm803 = vmor %vm801, %vm802
    %v804 = vsel %vm803, %v796, %v800
    %v805 = vand.u32 2147483647, %v795
    %vm806 = vcmp.eq.f32.partialorder %v805, 8.507059e+37
    %v807 = vand.u32 %v795, 2147483648
    %v808 = vor.u32 1.1754944e-38, %v807
    %v809 = vsel %vm806, %v808, %v804
    %v810 = vmul.f32 1.0, %v809
    %v811 = vrot.slane %v769, 4
    %v813 = vtanh.pop %v811
    %v814 = vrot.slane %v769, 6
    %v816 = vxor.u32 %v814, 2147483648
    %v817 = vmul.f32 %v816, 1.442695
    %v818 = vpow.pop %v817
    %v819 = vadd.f32 %v818, 1.0
    %v820 = vrcp.pop %v819
    %v821 = vmul.f32 %v819, %v820
    %v822 = vsub.f32 1.0, %v821
    %v823 = vmul.f32 %v820, %v822
    %v824 = vadd.f32 %v820, %v823
    %vm825 = vweird.f32 %v819
    %vm826 = vweird.f32 %v820
    %vm827 = vmor %vm825, %vm826
    %v828 = vsel %vm827, %v820, %v824
    %v829 = vand.u32 2147483647, %v819
    %vm830 = vcmp.eq.f32.partialorder %v829, 8.507059e+37
    %v831 = vand.u32 %v819, 2147483648
    %v832 = vor.u32 1.1754944e-38, %v831
    %v833 = vsel %vm830, %v832, %v828
    %v834 = vmul.f32 1.0, %v833
    %v835 = vmul.f32 %v810, %v661
    %v836 = vmul.f32 %v788, %v813
    %v837 = vadd.f32 %v835, %v836
    %v838 = vtanh.pop %v837
    %v839 = vmul.f32 %v834, %v838
    %v840 = vmul.f32 %v839, %v481
    %v841 = vsel %vm484, %v840, 0.0
    %842 = vadd.xlane.f32.xlu0 %v841
    %v843 = vpop.xlane.xlu0 %842
    %v844 = vadd.f32 %v843, %v488
    %v846 = vperm.slane %v844, %v492
    %848 = vst.msk [vmem:[%s6 + $0x2] sm:$0x1] %vm495, %v846
    %s849 = scalar_lea.vmem [#allocation2], 24
    %v850 = vld [vmem:[%s849] sm:$0xff]
    %v852 = vsel %vm302, %v839, 0
    %854 = vmatpush.msra.mxu0 0.0
    %855 = vmatpush.msra.mxu0 0.0
    %856 = vmatpush.msra.mxu0 0.0
    %857 = vmatpush.msra.mxu0 0.0
    %858 = vmatpush.msra.mxu0 0.0
    %859 = vmatpush.msra.mxu0 0.0
    %860 = vmatpush.msra.mxu0 0.0
    %861 = vmatpush.msra.mxu0 0.0
    %862 = vmatpush.msra.mxu0 0.0
    %863 = vmatpush.msra.mxu0 %v307
    %864 = vmatpush.msra.mxu0 %v291
    %865 = vmatpush.msra.mxu0 %v287
    %866 = vmatpush.msra.mxu0 %v283
    %867 = vmatpush.msra.mxu0 %v279
    %868 = vmatpush.msra.mxu0 %v275
    %869 = vmatpush.msra.mxu0 %v271
    %870 = vmatmul.f32.gmra.mxu0 %v852
    %v871 = vpop.f32.mrf.mxu0
    %v872 = vadd.f32 0.0, %v871
    %873 = vdwg.mxu0
    %874 = vmatpush.msra.mxu0 0.0
    %875 = vmatpush.msra.mxu0 0.0
    %876 = vmatpush.msra.mxu0 0.0
    %877 = vmatpush.msra.mxu0 0.0
    %878 = vmatpush.msra.mxu0 0.0
    %879 = vmatpush.msra.mxu0 0.0
    %880 = vmatpush.msra.mxu0 0.0
    %881 = vmatpush.msra.mxu0 0.0
    %882 = vmatpush.msra.mxu0 0.0
    %883 = vmatpush.msra.mxu0 %v310
    %884 = vmatpush.msra.mxu0 %v292
    %885 = vmatpush.msra.mxu0 %v288
    %886 = vmatpush.msra.mxu0 %v284
    %887 = vmatpush.msra.mxu0 %v280
    %888 = vmatpush.msra.mxu0 %v276
    %889 = vmatpush.msra.mxu0 %v272
    %890 = vmatmul.f32.gmra.mxu0 %v852
    %v891 = vpop.f32.mrf.mxu0
    %v892 = vadd.f32 0.0, %v891
    %893 = vdwg.mxu0
    %894 = vmatpush.msra.mxu0 0.0
    %895 = vmatpush.msra.mxu0 0.0
    %896 = vmatpush.msra.mxu0 0.0
    %897 = vmatpush.msra.mxu0 0.0
    %898 = vmatpush.msra.mxu0 0.0
    %899 = vmatpush.msra.mxu0 0.0
    %900 = vmatpush.msra.mxu0 0.0
    %901 = vmatpush.msra.mxu0 0.0
    %902 = vmatpush.msra.mxu0 0.0
    %903 = vmatpush.msra.mxu0 %v313
    %904 = vmatpush.msra.mxu0 %v293
    %905 = vmatpush.msra.mxu0 %v289
    %906 = vmatpush.msra.mxu0 %v285
    %907 = vmatpush.msra.mxu0 %v281
    %908 = vmatpush.msra.mxu0 %v277
    %909 = vmatpush.msra.mxu0 %v273
    %910 = vmatmul.f32.gmra.mxu0 %v852
    %v911 = vpop.f32.mrf.mxu0
    %v912 = vadd.f32 0.0, %v911
    %913 = vdwg.mxu0
    %914 = vmatpush.msra.mxu0 0.0
    %915 = vmatpush.msra.mxu0 0.0
    %916 = vmatpush.msra.mxu0 0.0
    %917 = vmatpush.msra.mxu0 0.0
    %918 = vmatpush.msra.mxu0 0.0
    %919 = vmatpush.msra.mxu0 0.0
    %920 = vmatpush.msra.mxu0 0.0
    %921 = vmatpush.msra.mxu0 0.0
    %922 = vmatpush.msra.mxu0 0.0
    %923 = vmatpush.msra.mxu0 %v316
    %924 = vmatpush.msra.mxu0 %v294
    %925 = vmatpush.msra.mxu0 %v290
    %926 = vmatpush.msra.mxu0 %v286
    %927 = vmatpush.msra.mxu0 %v282
    %928 = vmatpush.msra.mxu0 %v278
    %929 = vmatpush.msra.mxu0 %v274
    %930 = vmatmul.f32.gmra.mxu0 %v852
    %v931 = vpop.f32.mrf.mxu0
    %v932 = vadd.f32 0.0, %v931
    %933 = vdwg.mxu0
    %v938 = vrot.slane %v892, 6
    %v939 = vrot.slane %v912, 4
    %v940 = vrot.slane %v932, 2
    %v941 = vsel %vm228, %v872, %v938
    %v942 = vsel %vm230, %v939, %v940
    %v943 = vsel %vm232, %v941, %v942
    %v945 = vadd.f32 %v850, %v943
    %v946 = vxor.u32 %v945, 2147483648
    %v947 = vmul.f32 %v946, 1.442695
    %v948 = vpow.pop %v947
    %v949 = vadd.f32 %v948, 1.0
    %v950 = vrcp.pop %v949
    %v951 = vmul.f32 %v949, %v950
    %v952 = vsub.f32 1.0, %v951
    %v953 = vmul.f32 %v950, %v952
    %v954 = vadd.f32 %v950, %v953
    %vm955 = vweird.f32 %v949
    %vm956 = vweird.f32 %v950
    %vm957 = vmor %vm955, %vm956
    %v958 = vsel %vm957, %v950, %v954
    %v959 = vand.u32 2147483647, %v949
    %vm960 = vcmp.eq.f32.partialorder %v959, 8.507059e+37
    %v961 = vand.u32 %v949, 2147483648
    %v962 = vor.u32 1.1754944e-38, %v961
    %v963 = vsel %vm960, %v962, %v958
    %v964 = vmul.f32 1.0, %v963
    %v966 = vrot.slane %v945, 2
    %v968 = vxor.u32 %v966, 2147483648
    %v969 = vmul.f32 %v968, 1.442695
    %v970 = vpow.pop %v969
    %v971 = vadd.f32 %v970, 1.0
    %v972 = vrcp.pop %v971
    %v973 = vmul.f32 %v971, %v972
    %v974 = vsub.f32 1.0, %v973
    %v975 = vmul.f32 %v972, %v974
    %v976 = vadd.f32 %v972, %v975
    %vm977 = vweird.f32 %v971
    %vm978 = vweird.f32 %v972
    %vm979 = vmor %vm977, %vm978
    %v980 = vsel %vm979, %v972, %v976
    %v981 = vand.u32 2147483647, %v971
    %vm982 = vcmp.eq.f32.partialorder %v981, 8.507059e+37
    %v983 = vand.u32 %v971, 2147483648
    %v984 = vor.u32 1.1754944e-38, %v983
    %v985 = vsel %vm982, %v984, %v980
    %v986 = vmul.f32 1.0, %v985
    %v987 = vrot.slane %v945, 4
    %v989 = vtanh.pop %v987
    %v990 = vrot.slane %v945, 6
    %v992 = vxor.u32 %v990, 2147483648
    %v993 = vmul.f32 %v992, 1.442695
    %v994 = vpow.pop %v993
    %v995 = vadd.f32 %v994, 1.0
    %v996 = vrcp.pop %v995
    %v997 = vmul.f32 %v995, %v996
    %v998 = vsub.f32 1.0, %v997
    %v999 = vmul.f32 %v996, %v998
    %v1000 = vadd.f32 %v996, %v999
    %vm1001 = vweird.f32 %v995
    %vm1002 = vweird.f32 %v996
    %vm1003 = vmor %vm1001, %vm1002
    %v1004 = vsel %vm1003, %v996, %v1000
    %v1005 = vand.u32 2147483647, %v995
    %vm1006 = vcmp.eq.f32.partialorder %v1005, 8.507059e+37
    %v1007 = vand.u32 %v995, 2147483648
    %v1008 = vor.u32 1.1754944e-38, %v1007
    %v1009 = vsel %vm1006, %v1008, %v1004
    %v1010 = vmul.f32 1.0, %v1009
    %v1011 = vmul.f32 %v986, %v837
    %v1012 = vmul.f32 %v964, %v989
    %v1013 = vadd.f32 %v1011, %v1012
    %v1014 = vtanh.pop %v1013
    %v1015 = vmul.f32 %v1010, %v1014
    %v1016 = vmul.f32 %v1015, %v481
    %v1017 = vsel %vm484, %v1016, 0.0
    %1018 = vadd.xlane.f32.xlu0 %v1017
    %v1019 = vpop.xlane.xlu0 %1018
    %v1020 = vadd.f32 %v1019, %v488
    %v1022 = vperm.slane %v1020, %v492
    %1024 = vst.msk [vmem:[%s6 + $0x3] sm:$0x1] %vm495, %v1022
    %s1025 = scalar_lea.vmem [#allocation2], 32
    %v1026 = vld [vmem:[%s1025] sm:$0xff]
    %v1028 = vsel %vm302, %v1015, 0
    %1030 = vmatpush.msra.mxu0 0.0
    %1031 = vmatpush.msra.mxu0 0.0
    %1032 = vmatpush.msra.mxu0 0.0
    %1033 = vmatpush.msra.mxu0 0.0
    %1034 = vmatpush.msra.mxu0 0.0
    %1035 = vmatpush.msra.mxu0 0.0
    %1036 = vmatpush.msra.mxu0 0.0
    %1037 = vmatpush.msra.mxu0 0.0
    %1038 = vmatpush.msra.mxu0 0.0
    %1039 = vmatpush.msra.mxu0 %v307
    %1040 = vmatpush.msra.mxu0 %v291
    %1041 = vmatpush.msra.mxu0 %v287
    %1042 = vmatpush.msra.mxu0 %v283
    %1043 = vmatpush.msra.mxu0 %v279
    %1044 = vmatpush.msra.mxu0 %v275
    %1045 = vmatpush.msra.mxu0 %v271
    %1046 = vmatmul.f32.gmra.mxu0 %v1028
    %v1047 = vpop.f32.mrf.mxu0
    %v1048 = vadd.f32 0.0, %v1047
    %1049 = vdwg.mxu0
    %1050 = vmatpush.msra.mxu0 0.0
    %1051 = vmatpush.msra.mxu0 0.0
    %1052 = vmatpush.msra.mxu0 0.0
    %1053 = vmatpush.msra.mxu0 0.0
    %1054 = vmatpush.msra.mxu0 0.0
    %1055 = vmatpush.msra.mxu0 0.0
    %1056 = vmatpush.msra.mxu0 0.0
    %1057 = vmatpush.msra.mxu0 0.0
    %1058 = vmatpush.msra.mxu0 0.0
    %1059 = vmatpush.msra.mxu0 %v310
    %1060 = vmatpush.msra.mxu0 %v292
    %1061 = vmatpush.msra.mxu0 %v288
    %1062 = vmatpush.msra.mxu0 %v284
    %1063 = vmatpush.msra.mxu0 %v280
    %1064 = vmatpush.msra.mxu0 %v276
    %1065 = vmatpush.msra.mxu0 %v272
    %1066 = vmatmul.f32.gmra.mxu0 %v1028
    %v1067 = vpop.f32.mrf.mxu0
    %v1068 = vadd.f32 0.0, %v1067
    %1069 = vdwg.mxu0
    %1070 = vmatpush.msra.mxu0 0.0
    %1071 = vmatpush.msra.mxu0 0.0
    %1072 = vmatpush.msra.mxu0 0.0
    %1073 = vmatpush.msra.mxu0 0.0
    %1074 = vmatpush.msra.mxu0 0.0
    %1075 = vmatpush.msra.mxu0 0.0
    %1076 = vmatpush.msra.mxu0 0.0
    %1077 = vmatpush.msra.mxu0 0.0
    %1078 = vmatpush.msra.mxu0 0.0
    %1079 = vmatpush.msra.mxu0 %v313
    %1080 = vmatpush.msra.mxu0 %v293
    %1081 = vmatpush.msra.mxu0 %v289
    %1082 = vmatpush.msra.mxu0 %v285
    %1083 = vmatpush.msra.mxu0 %v281
    %1084 = vmatpush.msra.mxu0 %v277
    %1085 = vmatpush.msra.mxu0 %v273
    %1086 = vmatmul.f32.gmra.mxu0 %v1028
    %v1087 = vpop.f32.mrf.mxu0
    %v1088 = vadd.f32 0.0, %v1087
    %1089 = vdwg.mxu0
    %1090 = vmatpush.msra.mxu0 0.0
    %1091 = vmatpush.msra.mxu0 0.0
    %1092 = vmatpush.msra.mxu0 0.0
    %1093 = vmatpush.msra.mxu0 0.0
    %1094 = vmatpush.msra.mxu0 0.0
    %1095 = vmatpush.msra.mxu0 0.0
    %1096 = vmatpush.msra.mxu0 0.0
    %1097 = vmatpush.msra.mxu0 0.0
    %1098 = vmatpush.msra.mxu0 0.0
    %1099 = vmatpush.msra.mxu0 %v316
    %1100 = vmatpush.msra.mxu0 %v294
    %1101 = vmatpush.msra.mxu0 %v290
    %1102 = vmatpush.msra.mxu0 %v286
    %1103 = vmatpush.msra.mxu0 %v282
    %1104 = vmatpush.msra.mxu0 %v278
    %1105 = vmatpush.msra.mxu0 %v274
    %1106 = vmatmul.f32.gmra.mxu0 %v1028
    %v1107 = vpop.f32.mrf.mxu0
    %v1108 = vadd.f32 0.0, %v1107
    %1109 = vdwg.mxu0
    %v1114 = vrot.slane %v1068, 6
    %v1115 = vrot.slane %v1088, 4
    %v1116 = vrot.slane %v1108, 2
    %v1117 = vsel %vm228, %v1048, %v1114
    %v1118 = vsel %vm230, %v1115, %v1116
    %v1119 = vsel %vm232, %v1117, %v1118
    %v1121 = vadd.f32 %v1026, %v1119
    %v1122 = vxor.u32 %v1121, 2147483648
    %v1123 = vmul.f32 %v1122, 1.442695
    %v1124 = vpow.pop %v1123
    %v1125 = vadd.f32 %v1124, 1.0
    %v1126 = vrcp.pop %v1125
    %v1127 = vmul.f32 %v1125, %v1126
    %v1128 = vsub.f32 1.0, %v1127
    %v1129 = vmul.f32 %v1126, %v1128
    %v1130 = vadd.f32 %v1126, %v1129
    %vm1131 = vweird.f32 %v1125
    %vm1132 = vweird.f32 %v1126
    %vm1133 = vmor %vm1131, %vm1132
    %v1134 = vsel %vm1133, %v1126, %v1130
    %v1135 = vand.u32 2147483647, %v1125
    %vm1136 = vcmp.eq.f32.partialorder %v1135, 8.507059e+37
    %v1137 = vand.u32 %v1125, 2147483648
    %v1138 = vor.u32 1.1754944e-38, %v1137
    %v1139 = vsel %vm1136, %v1138, %v1134
    %v1140 = vmul.f32 1.0, %v1139
    %v1142 = vrot.slane %v1121, 2
    %v1144 = vxor.u32 %v1142, 2147483648
    %v1145 = vmul.f32 %v1144, 1.442695
    %v1146 = vpow.pop %v1145
    %v1147 = vadd.f32 %v1146, 1.0
    %v1148 = vrcp.pop %v1147
    %v1149 = vmul.f32 %v1147, %v1148
    %v1150 = vsub.f32 1.0, %v1149
    %v1151 = vmul.f32 %v1148, %v1150
    %v1152 = vadd.f32 %v1148, %v1151
    %vm1153 = vweird.f32 %v1147
    %vm1154 = vweird.f32 %v1148
    %vm1155 = vmor %vm1153, %vm1154
    %v1156 = vsel %vm1155, %v1148, %v1152
    %v1157 = vand.u32 2147483647, %v1147
    %vm1158 = vcmp.eq.f32.partialorder %v1157, 8.507059e+37
    %v1159 = vand.u32 %v1147, 2147483648
    %v1160 = vor.u32 1.1754944e-38, %v1159
    %v1161 = vsel %vm1158, %v1160, %v1156
    %v1162 = vmul.f32 1.0, %v1161
    %v1163 = vrot.slane %v1121, 4
    %v1165 = vtanh.pop %v1163
    %v1166 = vrot.slane %v1121, 6
    %v1168 = vxor.u32 %v1166, 2147483648
    %v1169 = vmul.f32 %v1168, 1.442695
    %v1170 = vpow.pop %v1169
    %v1171 = vadd.f32 %v1170, 1.0
    %v1172 = vrcp.pop %v1171
    %v1173 = vmul.f32 %v1171, %v1172
    %v1174 = vsub.f32 1.0, %v1173
    %v1175 = vmul.f32 %v1172, %v1174
    %v1176 = vadd.f32 %v1172, %v1175
    %vm1177 = vweird.f32 %v1171
    %vm1178 = vweird.f32 %v1172
    %vm1179 = vmor %vm1177, %vm1178
    %v1180 = vsel %vm1179, %v1172, %v1176
    %v1181 = vand.u32 2147483647, %v1171
    %vm1182 = vcmp.eq.f32.partialorder %v1181, 8.507059e+37
    %v1183 = vand.u32 %v1171, 2147483648
    %v1184 = vor.u32 1.1754944e-38, %v1183
    %v1185 = vsel %vm1182, %v1184, %v1180
    %v1186 = vmul.f32 1.0, %v1185
    %v1187 = vmul.f32 %v1162, %v1013
    %v1188 = vmul.f32 %v1140, %v1165
    %v1189 = vadd.f32 %v1187, %v1188
    %v1190 = vtanh.pop %v1189
    %v1191 = vmul.f32 %v1186, %v1190
    %v1192 = vmul.f32 %v1191, %v481
    %v1193 = vsel %vm484, %v1192, 0.0
    %1194 = vadd.xlane.f32.xlu0 %v1193
    %v1195 = vpop.xlane.xlu0 %1194
    %v1196 = vadd.f32 %v1195, %v488
    %v1198 = vperm.slane %v1196, %v492
    %1200 = vst.msk [vmem:[%s6 + $0x4] sm:$0x1] %vm495, %v1198
    %s1201 = scalar_lea.vmem [#allocation2], 40
    %v1202 = vld [vmem:[%s1201] sm:$0xff]
    %v1204 = vsel %vm302, %v1191, 0
    %1206 = vmatpush.msra.mxu0 0.0
    %1207 = vmatpush.msra.mxu0 0.0
    %1208 = vmatpush.msra.mxu0 0.0
    %1209 = vmatpush.msra.mxu0 0.0
    %1210 = vmatpush.msra.mxu0 0.0
    %1211 = vmatpush.msra.mxu0 0.0
    %1212 = vmatpush.msra.mxu0 0.0
    %1213 = vmatpush.msra.mxu0 0.0
    %1214 = vmatpush.msra.mxu0 0.0
    %1215 = vmatpush.msra.mxu0 %v307
    %1216 = vmatpush.msra.mxu0 %v291
    %1217 = vmatpush.msra.mxu0 %v287
    %1218 = vmatpush.msra.mxu0 %v283
    %1219 = vmatpush.msra.mxu0 %v279
    %1220 = vmatpush.msra.mxu0 %v275
    %1221 = vmatpush.msra.mxu0 %v271
    %1222 = vmatmul.f32.gmra.mxu0 %v1204
    %v1223 = vpop.f32.mrf.mxu0
    %v1224 = vadd.f32 0.0, %v1223
    %1225 = vdwg.mxu0
    %1226 = vmatpush.msra.mxu0 0.0
    %1227 = vmatpush.msra.mxu0 0.0
    %1228 = vmatpush.msra.mxu0 0.0
    %1229 = vmatpush.msra.mxu0 0.0
    %1230 = vmatpush.msra.mxu0 0.0
    %1231 = vmatpush.msra.mxu0 0.0
    %1232 = vmatpush.msra.mxu0 0.0
    %1233 = vmatpush.msra.mxu0 0.0
    %1234 = vmatpush.msra.mxu0 0.0
    %1235 = vmatpush.msra.mxu0 %v310
    %1236 = vmatpush.msra.mxu0 %v292
    %1237 = vmatpush.msra.mxu0 %v288
    %1238 = vmatpush.msra.mxu0 %v284
    %1239 = vmatpush.msra.mxu0 %v280
    %1240 = vmatpush.msra.mxu0 %v276
    %1241 = vmatpush.msra.mxu0 %v272
    %1242 = vmatmul.f32.gmra.mxu0 %v1204
    %v1243 = vpop.f32.mrf.mxu0
    %v1244 = vadd.f32 0.0, %v1243
    %1245 = vdwg.mxu0
    %1246 = vmatpush.msra.mxu0 0.0
    %1247 = vmatpush.msra.mxu0 0.0
    %1248 = vmatpush.msra.mxu0 0.0
    %1249 = vmatpush.msra.mxu0 0.0
    %1250 = vmatpush.msra.mxu0 0.0
    %1251 = vmatpush.msra.mxu0 0.0
    %1252 = vmatpush.msra.mxu0 0.0
    %1253 = vmatpush.msra.mxu0 0.0
    %1254 = vmatpush.msra.mxu0 0.0
    %1255 = vmatpush.msra.mxu0 %v313
    %1256 = vmatpush.msra.mxu0 %v293
    %1257 = vmatpush.msra.mxu0 %v289
    %1258 = vmatpush.msra.mxu0 %v285
    %1259 = vmatpush.msra.mxu0 %v281
    %1260 = vmatpush.msra.mxu0 %v277
    %1261 = vmatpush.msra.mxu0 %v273
    %1262 = vmatmul.f32.gmra.mxu0 %v1204
    %v1263 = vpop.f32.mrf.mxu0
    %v1264 = vadd.f32 0.0, %v1263
    %1265 = vdwg.mxu0
    %1266 = vmatpush.msra.mxu0 0.0
    %1267 = vmatpush.msra.mxu0 0.0
    %1268 = vmatpush.msra.mxu0 0.0
    %1269 = vmatpush.msra.mxu0 0.0
    %1270 = vmatpush.msra.mxu0 0.0
    %1271 = vmatpush.msra.mxu0 0.0
    %1272 = vmatpush.msra.mxu0 0.0
    %1273 = vmatpush.msra.mxu0 0.0
    %1274 = vmatpush.msra.mxu0 0.0
    %1275 = vmatpush.msra.mxu0 %v316
    %1276 = vmatpush.msra.mxu0 %v294
    %1277 = vmatpush.msra.mxu0 %v290
    %1278 = vmatpush.msra.mxu0 %v286
    %1279 = vmatpush.msra.mxu0 %v282
    %1280 = vmatpush.msra.mxu0 %v278
    %1281 = vmatpush.msra.mxu0 %v274
    %1282 = vmatmul.f32.gmra.mxu0 %v1204
    %v1283 = vpop.f32.mrf.mxu0
    %v1284 = vadd.f32 0.0, %v1283
    %1285 = vdwg.mxu0
    %v1290 = vrot.slane %v1244, 6
    %v1291 = vrot.slane %v1264, 4
    %v1292 = vrot.slane %v1284, 2
    %v1293 = vsel %vm228, %v1224, %v1290
    %v1294 = vsel %vm230, %v1291, %v1292
    %v1295 = vsel %vm232, %v1293, %v1294
    %v1297 = vadd.f32 %v1202, %v1295
    %v1298 = vxor.u32 %v1297, 2147483648
    %v1299 = vmul.f32 %v1298, 1.442695
    %v1300 = vpow.pop %v1299
    %v1301 = vadd.f32 %v1300, 1.0
    %v1302 = vrcp.pop %v1301
    %v1303 = vmul.f32 %v1301, %v1302
    %v1304 = vsub.f32 1.0, %v1303
    %v1305 = vmul.f32 %v1302, %v1304
    %v1306 = vadd.f32 %v1302, %v1305
    %vm1307 = vweird.f32 %v1301
    %vm1308 = vweird.f32 %v1302
    %vm1309 = vmor %vm1307, %vm1308
    %v1310 = vsel %vm1309, %v1302, %v1306
    %v1311 = vand.u32 2147483647, %v1301
    %vm1312 = vcmp.eq.f32.partialorder %v1311, 8.507059e+37
    %v1313 = vand.u32 %v1301, 2147483648
    %v1314 = vor.u32 1.1754944e-38, %v1313
    %v1315 = vsel %vm1312, %v1314, %v1310
    %v1316 = vmul.f32 1.0, %v1315
    %v1318 = vrot.slane %v1297, 2
    %v1320 = vxor.u32 %v1318, 2147483648
    %v1321 = vmul.f32 %v1320, 1.442695
    %v1322 = vpow.pop %v1321
    %v1323 = vadd.f32 %v1322, 1.0
    %v1324 = vrcp.pop %v1323
    %v1325 = vmul.f32 %v1323, %v1324
    %v1326 = vsub.f32 1.0, %v1325
    %v1327 = vmul.f32 %v1324, %v1326
    %v1328 = vadd.f32 %v1324, %v1327
    %vm1329 = vweird.f32 %v1323
    %vm1330 = vweird.f32 %v1324
    %vm1331 = vmor %vm1329, %vm1330
    %v1332 = vsel %vm1331, %v1324, %v1328
    %v1333 = vand.u32 2147483647, %v1323
    %vm1334 = vcmp.eq.f32.partialorder %v1333, 8.507059e+37
    %v1335 = vand.u32 %v1323, 2147483648
    %v1336 = vor.u32 1.1754944e-38, %v1335
    %v1337 = vsel %vm1334, %v1336, %v1332
    %v1338 = vmul.f32 1.0, %v1337
    %v1339 = vrot.slane %v1297, 4
    %v1341 = vtanh.pop %v1339
    %v1342 = vrot.slane %v1297, 6
    %v1344 = vxor.u32 %v1342, 2147483648
    %v1345 = vmul.f32 %v1344, 1.442695
    %v1346 = vpow.pop %v1345
    %v1347 = vadd.f32 %v1346, 1.0
    %v1348 = vrcp.pop %v1347
    %v1349 = vmul.f32 %v1347, %v1348
    %v1350 = vsub.f32 1.0, %v1349
    %v1351 = vmul.f32 %v1348, %v1350
    %v1352 = vadd.f32 %v1348, %v1351
    %vm1353 = vweird.f32 %v1347
    %vm1354 = vweird.f32 %v1348
    %vm1355 = vmor %vm1353, %vm1354
    %v1356 = vsel %vm1355, %v1348, %v1352
    %v1357 = vand.u32 2147483647, %v1347
    %vm1358 = vcmp.eq.f32.partialorder %v1357, 8.507059e+37
    %v1359 = vand.u32 %v1347, 2147483648
    %v1360 = vor.u32 1.1754944e-38, %v1359
    %v1361 = vsel %vm1358, %v1360, %v1356
    %v1362 = vmul.f32 1.0, %v1361
    %v1363 = vmul.f32 %v1338, %v1189
    %v1364 = vmul.f32 %v1316, %v1341
    %v1365 = vadd.f32 %v1363, %v1364
    %v1366 = vtanh.pop %v1365
    %v1367 = vmul.f32 %v1362, %v1366
    %v1368 = vmul.f32 %v1367, %v481
    %v1369 = vsel %vm484, %v1368, 0.0
    %1370 = vadd.xlane.f32.xlu0 %v1369
    %v1371 = vpop.xlane.xlu0 %1370
    %v1372 = vadd.f32 %v1371, %v488
    %v1374 = vperm.slane %v1372, %v492
    %1376 = vst.msk [vmem:[%s6 + $0x5] sm:$0x1] %vm495, %v1374
    %s1377 = scalar_lea.vmem [#allocation2], 48
    %v1378 = vld [vmem:[%s1377] sm:$0xff]
    %v1380 = vsel %vm302, %v1367, 0
    %1382 = vmatpush.msra.mxu0 0.0
    %1383 = vmatpush.msra.mxu0 0.0
    %1384 = vmatpush.msra.mxu0 0.0
    %1385 = vmatpush.msra.mxu0 0.0
    %1386 = vmatpush.msra.mxu0 0.0
    %1387 = vmatpush.msra.mxu0 0.0
    %1388 = vmatpush.msra.mxu0 0.0
    %1389 = vmatpush.msra.mxu0 0.0
    %1390 = vmatpush.msra.mxu0 0.0
    %1391 = vmatpush.msra.mxu0 %v307
    %1392 = vmatpush.msra.mxu0 %v291
    %1393 = vmatpush.msra.mxu0 %v287
    %1394 = vmatpush.msra.mxu0 %v283
    %1395 = vmatpush.msra.mxu0 %v279
    %1396 = vmatpush.msra.mxu0 %v275
    %1397 = vmatpush.msra.mxu0 %v271
    %1398 = vmatmul.f32.gmra.mxu0 %v1380
    %v1399 = vpop.f32.mrf.mxu0
    %v1400 = vadd.f32 0.0, %v1399
    %1401 = vdwg.mxu0
    %1402 = vmatpush.msra.mxu0 0.0
    %1403 = vmatpush.msra.mxu0 0.0
    %1404 = vmatpush.msra.mxu0 0.0
    %1405 = vmatpush.msra.mxu0 0.0
    %1406 = vmatpush.msra.mxu0 0.0
    %1407 = vmatpush.msra.mxu0 0.0
    %1408 = vmatpush.msra.mxu0 0.0
    %1409 = vmatpush.msra.mxu0 0.0
    %1410 = vmatpush.msra.mxu0 0.0
    %1411 = vmatpush.msra.mxu0 %v310
    %1412 = vmatpush.msra.mxu0 %v292
    %1413 = vmatpush.msra.mxu0 %v288
    %1414 = vmatpush.msra.mxu0 %v284
    %1415 = vmatpush.msra.mxu0 %v280
    %1416 = vmatpush.msra.mxu0 %v276
    %1417 = vmatpush.msra.mxu0 %v272
    %1418 = vmatmul.f32.gmra.mxu0 %v1380
    %v1419 = vpop.f32.mrf.mxu0
    %v1420 = vadd.f32 0.0, %v1419
    %1421 = vdwg.mxu0
    %1422 = vmatpush.msra.mxu0 0.0
    %1423 = vmatpush.msra.mxu0 0.0
    %1424 = vmatpush.msra.mxu0 0.0
    %1425 = vmatpush.msra.mxu0 0.0
    %1426 = vmatpush.msra.mxu0 0.0
    %1427 = vmatpush.msra.mxu0 0.0
    %1428 = vmatpush.msra.mxu0 0.0
    %1429 = vmatpush.msra.mxu0 0.0
    %1430 = vmatpush.msra.mxu0 0.0
    %1431 = vmatpush.msra.mxu0 %v313
    %1432 = vmatpush.msra.mxu0 %v293
    %1433 = vmatpush.msra.mxu0 %v289
    %1434 = vmatpush.msra.mxu0 %v285
    %1435 = vmatpush.msra.mxu0 %v281
    %1436 = vmatpush.msra.mxu0 %v277
    %1437 = vmatpush.msra.mxu0 %v273
    %1438 = vmatmul.f32.gmra.mxu0 %v1380
    %v1439 = vpop.f32.mrf.mxu0
    %v1440 = vadd.f32 0.0, %v1439
    %1441 = vdwg.mxu0
    %1442 = vmatpush.msra.mxu0 0.0
    %1443 = vmatpush.msra.mxu0 0.0
    %1444 = vmatpush.msra.mxu0 0.0
    %1445 = vmatpush.msra.mxu0 0.0
    %1446 = vmatpush.msra.mxu0 0.0
    %1447 = vmatpush.msra.mxu0 0.0
    %1448 = vmatpush.msra.mxu0 0.0
    %1449 = vmatpush.msra.mxu0 0.0
    %1450 = vmatpush.msra.mxu0 0.0
    %1451 = vmatpush.msra.mxu0 %v316
    %1452 = vmatpush.msra.mxu0 %v294
    %1453 = vmatpush.msra.mxu0 %v290
    %1454 = vmatpush.msra.mxu0 %v286
    %1455 = vmatpush.msra.mxu0 %v282
    %1456 = vmatpush.msra.mxu0 %v278
    %1457 = vmatpush.msra.mxu0 %v274
    %1458 = vmatmul.f32.gmra.mxu0 %v1380
    %v1459 = vpop.f32.mrf.mxu0
    %v1460 = vadd.f32 0.0, %v1459
    %1461 = vdwg.mxu0
    %v1466 = vrot.slane %v1420, 6
    %v1467 = vrot.slane %v1440, 4
    %v1468 = vrot.slane %v1460, 2
    %v1469 = vsel %vm228, %v1400, %v1466
    %v1470 = vsel %vm230, %v1467, %v1468
    %v1471 = vsel %vm232, %v1469, %v1470
    %v1473 = vadd.f32 %v1378, %v1471
    %v1474 = vxor.u32 %v1473, 2147483648
    %v1475 = vmul.f32 %v1474, 1.442695
    %v1476 = vpow.pop %v1475
    %v1477 = vadd.f32 %v1476, 1.0
    %v1478 = vrcp.pop %v1477
    %v1479 = vmul.f32 %v1477, %v1478
    %v1480 = vsub.f32 1.0, %v1479
    %v1481 = vmul.f32 %v1478, %v1480
    %v1482 = vadd.f32 %v1478, %v1481
    %vm1483 = vweird.f32 %v1477
    %vm1484 = vweird.f32 %v1478
    %vm1485 = vmor %vm1483, %vm1484
    %v1486 = vsel %vm1485, %v1478, %v1482
    %v1487 = vand.u32 2147483647, %v1477
    %vm1488 = vcmp.eq.f32.partialorder %v1487, 8.507059e+37
    %v1489 = vand.u32 %v1477, 2147483648
    %v1490 = vor.u32 1.1754944e-38, %v1489
    %v1491 = vsel %vm1488, %v1490, %v1486
    %v1492 = vmul.f32 1.0, %v1491
    %v1494 = vrot.slane %v1473, 2
    %v1496 = vxor.u32 %v1494, 2147483648
    %v1497 = vmul.f32 %v1496, 1.442695
    %v1498 = vpow.pop %v1497
    %v1499 = vadd.f32 %v1498, 1.0
    %v1500 = vrcp.pop %v1499
    %v1501 = vmul.f32 %v1499, %v1500
    %v1502 = vsub.f32 1.0, %v1501
    %v1503 = vmul.f32 %v1500, %v1502
    %v1504 = vadd.f32 %v1500, %v1503
    %vm1505 = vweird.f32 %v1499
    %vm1506 = vweird.f32 %v1500
    %vm1507 = vmor %vm1505, %vm1506
    %v1508 = vsel %vm1507, %v1500, %v1504
    %v1509 = vand.u32 2147483647, %v1499
    %vm1510 = vcmp.eq.f32.partialorder %v1509, 8.507059e+37
    %v1511 = vand.u32 %v1499, 2147483648
    %v1512 = vor.u32 1.1754944e-38, %v1511
    %v1513 = vsel %vm1510, %v1512, %v1508
    %v1514 = vmul.f32 1.0, %v1513
    %v1515 = vrot.slane %v1473, 4
    %v1517 = vtanh.pop %v1515
    %v1518 = vrot.slane %v1473, 6
    %v1520 = vxor.u32 %v1518, 2147483648
    %v1521 = vmul.f32 %v1520, 1.442695
    %v1522 = vpow.pop %v1521
    %v1523 = vadd.f32 %v1522, 1.0
    %v1524 = vrcp.pop %v1523
    %v1525 = vmul.f32 %v1523, %v1524
    %v1526 = vsub.f32 1.0, %v1525
    %v1527 = vmul.f32 %v1524, %v1526
    %v1528 = vadd.f32 %v1524, %v1527
    %vm1529 = vweird.f32 %v1523
    %vm1530 = vweird.f32 %v1524
    %vm1531 = vmor %vm1529, %vm1530
    %v1532 = vsel %vm1531, %v1524, %v1528
    %v1533 = vand.u32 2147483647, %v1523
    %vm1534 = vcmp.eq.f32.partialorder %v1533, 8.507059e+37
    %v1535 = vand.u32 %v1523, 2147483648
    %v1536 = vor.u32 1.1754944e-38, %v1535
    %v1537 = vsel %vm1534, %v1536, %v1532
    %v1538 = vmul.f32 1.0, %v1537
    %v1539 = vmul.f32 %v1514, %v1365
    %v1540 = vmul.f32 %v1492, %v1517
    %v1541 = vadd.f32 %v1539, %v1540
    %v1542 = vtanh.pop %v1541
    %v1543 = vmul.f32 %v1538, %v1542
    %v1544 = vmul.f32 %v1543, %v481
    %v1545 = vsel %vm484, %v1544, 0.0
    %1546 = vadd.xlane.f32.xlu0 %v1545
    %v1547 = vpop.xlane.xlu0 %1546
    %v1548 = vadd.f32 %v1547, %v488
    %v1550 = vperm.slane %v1548, %v492
    %1552 = vst.msk [vmem:[%s6 + $0x6] sm:$0x1] %vm495, %v1550
    %s1553 = scalar_lea.vmem [#allocation2], 56
    %v1554 = vld [vmem:[%s1553] sm:$0xff]
    %v1556 = vsel %vm302, %v1543, 0
    %1558 = vmatpush.msra.mxu0 0.0
    %1559 = vmatpush.msra.mxu0 0.0
    %1560 = vmatpush.msra.mxu0 0.0
    %1561 = vmatpush.msra.mxu0 0.0
    %1562 = vmatpush.msra.mxu0 0.0
    %1563 = vmatpush.msra.mxu0 0.0
    %1564 = vmatpush.msra.mxu0 0.0
    %1565 = vmatpush.msra.mxu0 0.0
    %1566 = vmatpush.msra.mxu0 0.0
    %1567 = vmatpush.msra.mxu0 %v307
    %1568 = vmatpush.msra.mxu0 %v291
    %1569 = vmatpush.msra.mxu0 %v287
    %1570 = vmatpush.msra.mxu0 %v283
    %1571 = vmatpush.msra.mxu0 %v279
    %1572 = vmatpush.msra.mxu0 %v275
    %1573 = vmatpush.msra.mxu0 %v271
    %1574 = vmatmul.f32.gmra.mxu0 %v1556
    %v1575 = vpop.f32.mrf.mxu0
    %v1576 = vadd.f32 0.0, %v1575
    %1577 = vdwg.mxu0
    %1578 = vmatpush.msra.mxu0 0.0
    %1579 = vmatpush.msra.mxu0 0.0
    %1580 = vmatpush.msra.mxu0 0.0
    %1581 = vmatpush.msra.mxu0 0.0
    %1582 = vmatpush.msra.mxu0 0.0
    %1583 = vmatpush.msra.mxu0 0.0
    %1584 = vmatpush.msra.mxu0 0.0
    %1585 = vmatpush.msra.mxu0 0.0
    %1586 = vmatpush.msra.mxu0 0.0
    %1587 = vmatpush.msra.mxu0 %v310
    %1588 = vmatpush.msra.mxu0 %v292
    %1589 = vmatpush.msra.mxu0 %v288
    %1590 = vmatpush.msra.mxu0 %v284
    %1591 = vmatpush.msra.mxu0 %v280
    %1592 = vmatpush.msra.mxu0 %v276
    %1593 = vmatpush.msra.mxu0 %v272
    %1594 = vmatmul.f32.gmra.mxu0 %v1556
    %v1595 = vpop.f32.mrf.mxu0
    %v1596 = vadd.f32 0.0, %v1595
    %1597 = vdwg.mxu0
    %1598 = vmatpush.msra.mxu0 0.0
    %1599 = vmatpush.msra.mxu0 0.0
    %1600 = vmatpush.msra.mxu0 0.0
    %1601 = vmatpush.msra.mxu0 0.0
    %1602 = vmatpush.msra.mxu0 0.0
    %1603 = vmatpush.msra.mxu0 0.0
    %1604 = vmatpush.msra.mxu0 0.0
    %1605 = vmatpush.msra.mxu0 0.0
    %1606 = vmatpush.msra.mxu0 0.0
    %1607 = vmatpush.msra.mxu0 %v313
    %1608 = vmatpush.msra.mxu0 %v293
    %1609 = vmatpush.msra.mxu0 %v289
    %1610 = vmatpush.msra.mxu0 %v285
    %1611 = vmatpush.msra.mxu0 %v281
    %1612 = vmatpush.msra.mxu0 %v277
    %1613 = vmatpush.msra.mxu0 %v273
    %1614 = vmatmul.f32.gmra.mxu0 %v1556
    %v1615 = vpop.f32.mrf.mxu0
    %v1616 = vadd.f32 0.0, %v1615
    %1617 = vdwg.mxu0
    %1618 = vmatpush.msra.mxu0 0.0
    %1619 = vmatpush.msra.mxu0 0.0
    %1620 = vmatpush.msra.mxu0 0.0
    %1621 = vmatpush.msra.mxu0 0.0
    %1622 = vmatpush.msra.mxu0 0.0
    %1623 = vmatpush.msra.mxu0 0.0
    %1624 = vmatpush.msra.mxu0 0.0
    %1625 = vmatpush.msra.mxu0 0.0
    %1626 = vmatpush.msra.mxu0 0.0
    %1627 = vmatpush.msra.mxu0 %v316
    %1628 = vmatpush.msra.mxu0 %v294
    %1629 = vmatpush.msra.mxu0 %v290
    %1630 = vmatpush.msra.mxu0 %v286
    %1631 = vmatpush.msra.mxu0 %v282
    %1632 = vmatpush.msra.mxu0 %v278
    %1633 = vmatpush.msra.mxu0 %v274
    %1634 = vmatmul.f32.gmra.mxu0 %v1556
    %v1635 = vpop.f32.mrf.mxu0
    %v1636 = vadd.f32 0.0, %v1635
    %1637 = vdwg.mxu0
    %v1642 = vrot.slane %v1596, 6
    %v1643 = vrot.slane %v1616, 4
    %v1644 = vrot.slane %v1636, 2
    %v1645 = vsel %vm228, %v1576, %v1642
    %v1646 = vsel %vm230, %v1643, %v1644
    %v1647 = vsel %vm232, %v1645, %v1646
    %v1649 = vadd.f32 %v1554, %v1647
    %v1650 = vxor.u32 %v1649, 2147483648
    %v1651 = vmul.f32 %v1650, 1.442695
    %v1652 = vpow.pop %v1651
    %v1653 = vadd.f32 %v1652, 1.0
    %v1654 = vrcp.pop %v1653
    %v1655 = vmul.f32 %v1653, %v1654
    %v1656 = vsub.f32 1.0, %v1655
    %v1657 = vmul.f32 %v1654, %v1656
    %v1658 = vadd.f32 %v1654, %v1657
    %vm1659 = vweird.f32 %v1653
    %vm1660 = vweird.f32 %v1654
    %vm1661 = vmor %vm1659, %vm1660
    %v1662 = vsel %vm1661, %v1654, %v1658
    %v1663 = vand.u32 2147483647, %v1653
    %vm1664 = vcmp.eq.f32.partialorder %v1663, 8.507059e+37
    %v1665 = vand.u32 %v1653, 2147483648
    %v1666 = vor.u32 1.1754944e-38, %v1665
    %v1667 = vsel %vm1664, %v1666, %v1662
    %v1668 = vmul.f32 1.0, %v1667
    %v1670 = vrot.slane %v1649, 2
    %v1672 = vxor.u32 %v1670, 2147483648
    %v1673 = vmul.f32 %v1672, 1.442695
    %v1674 = vpow.pop %v1673
    %v1675 = vadd.f32 %v1674, 1.0
    %v1676 = vrcp.pop %v1675
    %v1677 = vmul.f32 %v1675, %v1676
    %v1678 = vsub.f32 1.0, %v1677
    %v1679 = vmul.f32 %v1676, %v1678
    %v1680 = vadd.f32 %v1676, %v1679
    %vm1681 = vweird.f32 %v1675
    %vm1682 = vweird.f32 %v1676
    %vm1683 = vmor %vm1681, %vm1682
    %v1684 = vsel %vm1683, %v1676, %v1680
    %v1685 = vand.u32 2147483647, %v1675
    %vm1686 = vcmp.eq.f32.partialorder %v1685, 8.507059e+37
    %v1687 = vand.u32 %v1675, 2147483648
    %v1688 = vor.u32 1.1754944e-38, %v1687
    %v1689 = vsel %vm1686, %v1688, %v1684
    %v1690 = vmul.f32 1.0, %v1689
    %v1691 = vrot.slane %v1649, 4
    %v1693 = vtanh.pop %v1691
    %v1694 = vrot.slane %v1649, 6
    %v1696 = vxor.u32 %v1694, 2147483648
    %v1697 = vmul.f32 %v1696, 1.442695
    %v1698 = vpow.pop %v1697
    %v1699 = vadd.f32 %v1698, 1.0
    %v1700 = vrcp.pop %v1699
    %v1701 = vmul.f32 %v1699, %v1700
    %v1702 = vsub.f32 1.0, %v1701
    %v1703 = vmul.f32 %v1700, %v1702
    %v1704 = vadd.f32 %v1700, %v1703
    %vm1705 = vweird.f32 %v1699
    %vm1706 = vweird.f32 %v1700
    %vm1707 = vmor %vm1705, %vm1706
    %v1708 = vsel %vm1707, %v1700, %v1704
    %v1709 = vand.u32 2147483647, %v1699
    %vm1710 = vcmp.eq.f32.partialorder %v1709, 8.507059e+37
    %v1711 = vand.u32 %v1699, 2147483648
    %v1712 = vor.u32 1.1754944e-38, %v1711
    %v1713 = vsel %vm1710, %v1712, %v1708
    %v1714 = vmul.f32 1.0, %v1713
    %v1715 = vmul.f32 %v1690, %v1541
    %v1716 = vmul.f32 %v1668, %v1693
    %v1717 = vadd.f32 %v1715, %v1716
    %v1718 = vtanh.pop %v1717
    %v1719 = vmul.f32 %v1714, %v1718
    %v1720 = vmul.f32 %v1719, %v481
    %v1721 = vsel %vm484, %v1720, 0.0
    %1722 = vadd.xlane.f32.xlu0 %v1721
    %v1723 = vpop.xlane.xlu0 %1722
    %v1724 = vadd.f32 %v1723, %v488
    %v1726 = vperm.slane %v1724, %v492
    %1728 = vst.msk [vmem:[%s6 + $0x7] sm:$0x1] %vm495, %v1726
    // Predicated region
    $region30: #{tpu_custom_call.1} parent=1 // pred_check
      _
    $region31: #{tpu_custom_call.1} parent=1 // pred_check_branch
      %1730 = sbr.rel (0) target = $region33
    $region32: #{tpu_custom_call.1} parent=1 // pred_region
      _
    $region33: #{tpu_custom_call.1} parent=1 // pred_fallthru
      _
    // Predicated region
    $region34: #{tpu_custom_call.1} parent=1 // pred_check
      _
    $region35: #{tpu_custom_call.1} parent=1 // pred_check_branch
      %1732 = sbr.rel (0) target = $region37
    $region36: #{tpu_custom_call.1} parent=1 // pred_region
      _
    $region37: #{tpu_custom_call.1} parent=1 // pred_fallthru
      _
    %1733 = vsyncpa [#allocation5], 1

</llo_original>
